<compile_context>
chip_gen: v6e
topology: v6e:2x2x1
jax: 0.10.0
libtpu: 0.0.40
codegen_flags: <defaults>
</compile_context>

<pallas_src>
import math

import jax
import jax.numpy as jnp
from jax.experimental import pallas as pl
from jax.experimental.pallas import tpu as pltpu


def _make_primary_caps_kernel(KH, KW, SH, SW, Ho, Wo, Cp):
    """Builds the kernel body with static conv geometry baked in."""

    def kernel(x_ref, w_ref, b_ref, o_ref):
        # x_ref : (nb, H, W, A)            NHWC input block (nb = 1 per program)
        # w_ref : (KH*KW*A, Cpad)          fused pose|act weights, zero-padded
        # b_ref : (1, Cpad)                fused pose|act bias, zero-padded, f32
        # o_ref : (nb, Ho, Wo, Cpad)       lane-dense combined output
        x = x_ref[...]                     # keep native dtype (bf16-friendly)
        nb = x.shape[0]
        A = x.shape[-1]
        Cpad = o_ref.shape[-1]

        # In-kernel im2col: one lane-axis concat of the KH*KW taps, then a
        # single MXU matmul with contraction depth KH*KW*A.
        taps = [
            x[:,
              kh:kh + SH * (Ho - 1) + 1:SH,
              kw:kw + SW * (Wo - 1) + 1:SW,
              :]                            # (nb, Ho, Wo, A)
            for kh in range(KH) for kw in range(KW)
        ]
        lhs = jnp.concatenate(taps, axis=-1)             # (nb, Ho, Wo, KH*KW*A)
        lhs2 = lhs.reshape(nb * Ho * Wo, KH * KW * A)    # (rows, KH*KW*A)

        # One fused matmul for pose + activation (epilogue in f32).
        z = jnp.dot(lhs2, w_ref[...], preferred_element_type=jnp.float32)
        z = z + b_ref[...]                               # (1, Cpad) broadcast

        # Selective epilogue keeps the store full-width / lane-dense:
        # pose lanes pass through, activation (and pad) lanes get sigmoid.
        lane = jax.lax.broadcasted_iota(jnp.int32, z.shape, 1)
        sig = pl.reciprocal(1.0 + jnp.exp(-z))           # exact reciprocal
        out = jnp.where(lane < Cp, z, sig)

        o_ref[...] = out.reshape(nb, Ho, Wo, Cpad).astype(o_ref.dtype)

    return kernel


def primary_caps_forward(x_nchw, w_pose, b_pose, w_a, b_a, stride=(1, 1)):
    """PrimaryCaps forward (inference).

    x_nchw : (N, A, H, W)
    w_pose : (KH, KW, A, B*dim)   HWIO
    b_pose : (B*dim,)
    w_a    : (KH, KW, A, B)       HWIO
    b_a    : (B,)
    returns (poses, activations) in NCHW: (N, B*dim, Ho, Wo), (N, B, Ho, Wo)
    """
    N, A, H, W = x_nchw.shape
    KH, KW = w_pose.shape[0], w_pose.shape[1]
    SH, SW = stride
    Ho = (H - KH) // SH + 1
    Wo = (W - KW) // SW + 1
    Cp = w_pose.shape[-1]
    Ca = w_a.shape[-1]
    C_used = Cp + Ca
    Cpad = ((C_used + 127) // 128) * 128     # lane-dense output width
    Kdim = KH * KW * A

    x_nhwc = jnp.transpose(x_nchw, (0, 2, 3, 1))

    # Fuse the two convs: concat pose|act along Cout, zero-pad to Cpad lanes,
    # and reshape to a dense 2D (KH*KW*A, Cpad) weight matching the im2col
    # ordering (kh-major, then kw, then input channel).
    w_comb = jnp.concatenate([w_pose, w_a], axis=-1)             # (KH,KW,A,C_used)
    w_comb = jnp.pad(w_comb, ((0, 0), (0, 0), (0, 0), (0, Cpad - C_used)))
    w_comb = w_comb.reshape(Kdim, Cpad)
    b_comb = jnp.concatenate([b_pose, b_a])
    b_comb = jnp.pad(b_comb, (0, Cpad - C_used)).reshape(1, Cpad)
    b_comb = b_comb.astype(jnp.float32)

    kernel = _make_primary_caps_kernel(KH, KW, SH, SW, Ho, Wo, Cp)

    # Grid over batch: one image per program (tiny here; at production sizes
    # pick the largest batch/row block that fits the scoped-VMEM budget
    # double-buffered: 16 MiB default on v5e, 32 MiB on v6e/v7x).
    out = pl.pallas_call(
        kernel,
        grid=(N,),
        in_specs=[
            pl.BlockSpec((1, H, W, A), lambda n: (n, 0, 0, 0)),
            pl.BlockSpec((Kdim, Cpad), lambda n: (0, 0)),
            pl.BlockSpec((1, Cpad), lambda n: (0, 0)),
        ],
        out_specs=pl.BlockSpec((1, Ho, Wo, Cpad), lambda n: (n, 0, 0, 0)),
        out_shape=jax.ShapeDtypeStruct((N, Ho, Wo, Cpad), x_nchw.dtype),
        compiler_params=pltpu.CompilerParams(
            dimension_semantics=("parallel",),     # shards over v7x's 2 TCs
            vmem_limit_bytes=32 * 1024 * 1024,
        ),
    )(x_nhwc, w_comb, b_comb)

    # Split the lane-dense slab.  NOTE: if the downstream (ConvCaps) layer can
    # consume NHWC, skip these transposes and hand it out[..., :Cp] /
    # out[..., Cp:C_used] directly to avoid an extra HBM round-trip.
    poses = jnp.transpose(out[..., :Cp], (0, 3, 1, 2))
    acts = jnp.transpose(out[..., Cp:C_used], (0, 3, 1, 2))
    return poses, acts


def _reference_forward(x_nchw, w_pose, b_pose, w_a, b_a, stride=(1, 1)):
    """Pure-JAX reference (lax conv), for correctness checking."""
    dn = ("NCHW", "HWIO", "NCHW")
    p = jax.lax.conv_general_dilated(
        x_nchw, w_pose, stride, "VALID", dimension_numbers=dn
    ) + b_pose.reshape(1, -1, 1, 1)
    a = jax.lax.conv_general_dilated(
        x_nchw, w_a, stride, "VALID", dimension_numbers=dn
    ) + b_a.reshape(1, -1, 1, 1)
    return p, jax.nn.sigmoid(a)


if __name__ == "__main__":
    # Module hyperparameters (small, consistent with the PyTorch module).
    A, B, dim = 4, 4, 16
    K = (3, 3)
    stride = (1, 1)
    N, H, W = 2, 16, 16

    key = jax.random.PRNGKey(0)
    k_x, k_wp, k_bp, k_wa, k_ba = jax.random.split(key, 5)

    # Deterministic parameter init mirroring __init__ shapes:
    #   pose: Conv2d(A, B*dim, K) -> weight ~ N(0, 0.1); a: Conv2d(A, B, K).
    # Stored directly in HWIO layout (KH, KW, A, Cout).
    fan_in = A * K[0] * K[1]
    bound = 1.0 / math.sqrt(fan_in)
    w_pose = 0.1 * jax.random.normal(k_wp, (K[0], K[1], A, B * dim), jnp.float32)
    b_pose = jax.random.uniform(k_bp, (B * dim,), jnp.float32, -bound, bound)
    w_a = 0.1 * jax.random.normal(k_wa, (K[0], K[1], A, B), jnp.float32)
    b_a = jax.random.uniform(k_ba, (B,), jnp.float32, -bound, bound)

    x = jax.random.normal(k_x, (N, A, H, W), jnp.float32)

    poses, acts = primary_caps_forward(x, w_pose, b_pose, w_a, b_a, stride)
    poses = jax.block_until_ready(poses)
    acts = jax.block_until_ready(acts)

    # Shape check against the documented output contract.
    Ho = (H - K[0]) // stride[0] + 1
    Wo = (W - K[1]) // stride[1] + 1
    assert poses.shape == (N, B * dim, Ho, Wo), poses.shape
    assert acts.shape == (N, B, Ho, Wo), acts.shape

    # Numerical check against the pure-JAX reference convs.
    p_ref, a_ref = _reference_forward(x, w_pose, b_pose, w_a, b_a, stride)
    assert jnp.allclose(poses, p_ref, atol=1e-4, rtol=1e-4)
    assert jnp.allclose(acts, a_ref, atol=1e-4, rtol=1e-4)

    print("KERNEL_OK")
</pallas_src>

<mosaic_0001>
module attributes {stable_mosaic.version = 11 : i64} {
  func.func @kernel(%arg0: i32, %arg1: memref<1x16x16x4xf32, #tpu.memory_space<vmem>>, %arg2: memref<36x128xf32, #tpu.memory_space<vmem>>, %arg3: memref<1x128xf32, #tpu.memory_space<vmem>>, %arg4: memref<1x14x14x128xf32, #tpu.memory_space<vmem>>) attributes {dimension_semantics = [#tpu.dimension_semantics<parallel>], iteration_bounds = array<i64: 2>, scalar_prefetch = 0 : i64, scratch_operands = 0 : i64, tpu.core_type = #tpu.core_type<tc>, window_params = [{transform_indices = @transform_0, window_bounds = array<i64: 1, 16, 16, 4>}, {pipeline_mode = #tpu.pipeline_mode<synchronous>, transform_indices = @transform_1, window_bounds = array<i64: 36, 128>}, {pipeline_mode = #tpu.pipeline_mode<synchronous>, transform_indices = @transform_2, window_bounds = array<i64: 1, 128>}, {transform_indices = @transform_3, window_bounds = array<i64: 1, 14, 14, 128>}]} {
    %c0 = arith.constant 0 : index
    %c0_0 = arith.constant 0 : index
    %c0_1 = arith.constant 0 : index
    %c0_2 = arith.constant 0 : index
    %0 = vector.load %arg1[%c0, %c0_0, %c0_1, %c0_2] : memref<1x16x16x4xf32, #tpu.memory_space<vmem>>, vector<1x16x16x4xf32>
    %1 = vector.extract_strided_slice %0 {offsets = [0, 0, 0, 0], sizes = [1, 14, 14, 4], strides = [1, 1, 1, 1]} : vector<1x16x16x4xf32> to vector<1x14x14x4xf32>
    %2 = vector.extract_strided_slice %0 {offsets = [0, 0, 1, 0], sizes = [1, 14, 14, 4], strides = [1, 1, 1, 1]} : vector<1x16x16x4xf32> to vector<1x14x14x4xf32>
    %3 = vector.extract_strided_slice %0 {offsets = [0, 0, 2, 0], sizes = [1, 14, 14, 4], strides = [1, 1, 1, 1]} : vector<1x16x16x4xf32> to vector<1x14x14x4xf32>
    %4 = vector.extract_strided_slice %0 {offsets = [0, 1, 0, 0], sizes = [1, 14, 14, 4], strides = [1, 1, 1, 1]} : vector<1x16x16x4xf32> to vector<1x14x14x4xf32>
    %5 = vector.extract_strided_slice %0 {offsets = [0, 1, 1, 0], sizes = [1, 14, 14, 4], strides = [1, 1, 1, 1]} : vector<1x16x16x4xf32> to vector<1x14x14x4xf32>
    %6 = vector.extract_strided_slice %0 {offsets = [0, 1, 2, 0], sizes = [1, 14, 14, 4], strides = [1, 1, 1, 1]} : vector<1x16x16x4xf32> to vector<1x14x14x4xf32>
    %7 = vector.extract_strided_slice %0 {offsets = [0, 2, 0, 0], sizes = [1, 14, 14, 4], strides = [1, 1, 1, 1]} : vector<1x16x16x4xf32> to vector<1x14x14x4xf32>
    %8 = vector.extract_strided_slice %0 {offsets = [0, 2, 1, 0], sizes = [1, 14, 14, 4], strides = [1, 1, 1, 1]} : vector<1x16x16x4xf32> to vector<1x14x14x4xf32>
    %9 = vector.extract_strided_slice %0 {offsets = [0, 2, 2, 0], sizes = [1, 14, 14, 4], strides = [1, 1, 1, 1]} : vector<1x16x16x4xf32> to vector<1x14x14x4xf32>
    %10 = tpu.concatenate %1, %2, %3, %4, %5, %6, %7, %8, %9 in 3 : vector<1x14x14x4xf32>, vector<1x14x14x4xf32>, vector<1x14x14x4xf32>, vector<1x14x14x4xf32>, vector<1x14x14x4xf32>, vector<1x14x14x4xf32>, vector<1x14x14x4xf32>, vector<1x14x14x4xf32>, vector<1x14x14x4xf32> -> vector<1x14x14x36xf32>
    %11 = vector.shape_cast %10 : vector<1x14x14x36xf32> to vector<196x36xf32>
    %c0_3 = arith.constant 0 : index
    %c0_4 = arith.constant 0 : index
    %12 = vector.load %arg2[%c0_3, %c0_4] : memref<36x128xf32, #tpu.memory_space<vmem>>, vector<36x128xf32>
    %cst = arith.constant dense<0.000000e+00> : vector<196x128xf32>
    %13 = tpu.matmul %11, %12, %cst {dimension_numbers = #tpu.dot_dimension_numbers<[1], [0], [0], [1], [0, 0, 1, 1], [], []>} : vector<196x36xf32>, vector<36x128xf32>, vector<196x128xf32> -> vector<196x128xf32>
    %c0_5 = arith.constant 0 : index
    %c0_6 = arith.constant 0 : index
    %14 = vector.load %arg3[%c0_5, %c0_6] : memref<1x128xf32, #tpu.memory_space<vmem>>, vector<1x128xf32>
    %15 = vector.broadcast %14 : vector<1x128xf32> to vector<196x128xf32>
    %16 = arith.addf %13, %15 : vector<196x128xf32>
    %17 = tpu.iota {dimensions = array<i32: 1>} : vector<196x128xi32>
    %cst_7 = arith.constant 0.000000e+00 : f32
    %18 = vector.broadcast %cst_7 : f32 to vector<196x128xf32>
    %19 = arith.subf %18, %16 : vector<196x128xf32>
    %20 = math.exp %19 : vector<196x128xf32>
    %cst_8 = arith.constant 1.000000e+00 : f32
    %21 = vector.broadcast %cst_8 : f32 to vector<196x128xf32>
    %22 = arith.addf %21, %20 : vector<196x128xf32>
    %23 = tpu.reciprocal %22 : vector<196x128xf32> -> vector<196x128xf32>
    %c64_i32 = arith.constant 64 : i32
    %24 = vector.broadcast %c64_i32 : i32 to vector<196x128xi32>
    %25 = arith.cmpi slt, %17, %24 : vector<196x128xi32>
    %26 = arith.select %25, %16, %23 : vector<196x128xi1>, vector<196x128xf32>
    %27 = vector.shape_cast %26 : vector<196x128xf32> to vector<1x14x14x128xf32>
    %c0_9 = arith.constant 0 : index
    %c0_10 = arith.constant 0 : index
    %c0_11 = arith.constant 0 : index
    %c0_12 = arith.constant 0 : index
    %28 = vector.load %arg4[%c0_9, %c0_10, %c0_11, %c0_12] : memref<1x14x14x128xf32, #tpu.memory_space<vmem>>, vector<1x14x14x128xf32>
    tpu.vector_store %arg4[%c0_9, %c0_10, %c0_11, %c0_12], %27 {strides = array<i32>} : memref<1x14x14x128xf32, #tpu.memory_space<vmem>>, vector<1x14x14x128xf32>,
    return
  }
  func.func @transform_0(%arg0: i32) -> (i32, i32, i32, i32) {
    %c0_i32 = arith.constant 0 : i32
    %c0_i32_0 = arith.constant 0 : i32
    %c0_i32_1 = arith.constant 0 : i32
    %c0_i32_2 = arith.constant 0 : i32
    return %arg0, %c0_i32, %c0_i32_0, %c0_i32_1 : i32, i32, i32, i32
  }
  func.func @transform_1(%arg0: i32) -> (i32, i32) {
    %c0_i32 = arith.constant 0 : i32
    %c0_i32_0 = arith.constant 0 : i32
    %c0_i32_1 = arith.constant 0 : i32
    return %c0_i32, %c0_i32_0 : i32, i32
  }
  func.func @transform_2(%arg0: i32) -> (i32, i32) {
    %c0_i32 = arith.constant 0 : i32
    %c0_i32_0 = arith.constant 0 : i32
    %c0_i32_1 = arith.constant 0 : i32
    return %c0_i32, %c0_i32_0 : i32, i32
  }
  func.func @transform_3(%arg0: i32) -> (i32, i32, i32, i32) {
    %c0_i32 = arith.constant 0 : i32
    %c0_i32_0 = arith.constant 0 : i32
    %c0_i32_1 = arith.constant 0 : i32
    %c0_i32_2 = arith.constant 0 : i32
    return %arg0, %c0_i32, %c0_i32_0, %c0_i32_1 : i32, i32, i32, i32
  }
}

</mosaic_0001>

<llo_original>
// kernel: tpu_custom_call.1
$region0: #{tpu_custom_call.1}
  #allocation0 [shape = 'u32[]', space=smem, size = 0x4, offset = 0x4, fixed_abs, tag = 'smem constant byte address 0x4 - core index']
  #allocation1 [shape = 'u32[144,128]{1,0:T(1,128)}', space=vmem, size = 0x12000, scoped, tag = 'internal scratch']
  %s0 = inlined_call_operand.vmem [shape: f32[2,16,16,4], index: 0, kind: input, shape index: {}]
  %s1 = inlined_call_operand.vmem [shape: f32[36,128], index: 1, kind: input, shape index: {}]
  %s2 = inlined_call_operand.vmem [shape: f32[1,128], index: 2, kind: input, shape index: {}]
  %s3 = inlined_call_operand.vmem [shape: f32[2,14,14,128], index: 3, kind: output, shape index: {}]
  %s4 = sld [smem:[#allocation0]]
  $region45: #{tpu_custom_call.1} parent=0
    _
  %s6 = ssub.s32 1, %s4
  %s7 = scalar_select 0, %s6, %s4
  loop: start=0, step=1, limit=4
  $region2: #{tpu_custom_call.1} parent=0 // loop_pre_header
    _
  $region3: #{tpu_custom_call.1} parent=0 // loop_header
    %s9 = sphi 0, %s13
    %p10 = scmp.ge.s32.totalorder %s9, 4
    %s19 = sphi 0, %s21
    %s22 = sphi 0, %s19
    %s23 = sphi 0, %s22
    %s39 = sphi 0, %s23
    %s43 = sphi 0, %s43
    %s45 = sphi 0, %s43
    %s46 = sphi 0, %s45
    %s60 = sphi 0, %s46
    %s64 = sphi 0, %s64
    %s66 = sphi 0, %s64
    %s67 = sphi 0, %s66
    %s81 = sphi 0, %s67
    %s87 = sphi 0, %s89
    %s90 = sphi 0, %s87
    %s91 = sphi 0, %s90
    %s107 = sphi 0, %s91
  $region4: #{tpu_custom_call.1} parent=0 // loop_header_branch
    %12 = sbr.rel (%p10) target = $region8
  $region5: #{tpu_custom_call.1} parent=0 // loop_body
    %s14 = ssub.s32 %s9, 1
    %s15 = ssub.s32 %s9, 2
    %s16 = sadd.s32 %s9, 1
    %s17 = ssub.s32 %s9, %s16
    %p18 = scmp.eq.s32.totalorder %s17, 0
    %s20 = sadd.s32 %s19, 1
    %s21 = scalar_select %p18, %s19, %s20
    %p24 = pneg %p18
    %p25 = scmp.eq.s32.totalorder %s9, 1
    %p26 = por %p24, %p25
    %p27 = scmp.ne.s32.totalorder %s19, %s22
    %p28 = scmp.eq.s32.totalorder %s9, 0
    %p29 = por %p27, %p28
    %p30 = scmp.ne.s32.totalorder %s19, %s22
    %p31 = scmp.eq.s32.totalorder %s14, 1
    %p32 = por %p30, %p31
    %p33 = scmp.ne.s32.totalorder %s22, %s23
    %p34 = scmp.eq.s32.totalorder %s14, 0
    %p35 = por %p33, %p34
    %p36 = scmp.ne.s32.totalorder %s22, %s23
    %p37 = scmp.eq.s32.totalorder %s15, 1
    %p38 = por %p36, %p37
    %p40 = scmp.ne.s32.totalorder %s23, %s39
    %p41 = scmp.eq.s32.totalorder %s15, 0
    %p42 = por %p40, %p41
    %s44 = sadd.s32 %s43, 1
    %p47 = scmp.eq.s32.totalorder %s9, 1
    %p48 = scmp.ne.s32.totalorder %s43, %s45
    %p49 = scmp.eq.s32.totalorder %s9, 0
    %p50 = por %p48, %p49
    %p51 = scmp.ne.s32.totalorder %s43, %s45
    %p52 = scmp.eq.s32.totalorder %s14, 1
    %p53 = por %p51, %p52
    %p54 = scmp.ne.s32.totalorder %s45, %s46
    %p55 = scmp.eq.s32.totalorder %s14, 0
    %p56 = por %p54, %p55
    %p57 = scmp.ne.s32.totalorder %s45, %s46
    %p58 = scmp.eq.s32.totalorder %s15, 1
    %p59 = por %p57, %p58
    %p61 = scmp.ne.s32.totalorder %s46, %s60
    %p62 = scmp.eq.s32.totalorder %s15, 0
    %p63 = por %p61, %p62
    %s65 = sadd.s32 %s64, 1
    %p68 = scmp.eq.s32.totalorder %s9, 1
    %p69 = scmp.ne.s32.totalorder %s64, %s66
    %p70 = scmp.eq.s32.totalorder %s9, 0
    %p71 = por %p69, %p70
    %p72 = scmp.ne.s32.totalorder %s64, %s66
    %p73 = scmp.eq.s32.totalorder %s14, 1
    %p74 = por %p72, %p73
    %p75 = scmp.ne.s32.totalorder %s66, %s67
    %p76 = scmp.eq.s32.totalorder %s14, 0
    %p77 = por %p75, %p76
    %p78 = scmp.ne.s32.totalorder %s66, %s67
    %p79 = scmp.eq.s32.totalorder %s15, 1
    %p80 = por %p78, %p79
    %p82 = scmp.ne.s32.totalorder %s67, %s81
    %p83 = scmp.eq.s32.totalorder %s15, 0
    %p84 = por %p82, %p83
    %s85 = ssub.s32 %s9, %s16
    %p86 = scmp.eq.s32.totalorder %s85, 0
    %s88 = sadd.s32 %s87, 1
    %s89 = scalar_select %p86, %s87, %s88
    %p92 = pneg %p86
    %p93 = scmp.eq.s32.totalorder %s9, 1
    %p94 = por %p92, %p93
    %p95 = scmp.ne.s32.totalorder %s87, %s90
    %p96 = scmp.eq.s32.totalorder %s9, 0
    %p97 = por %p95, %p96
    %p98 = scmp.ne.s32.totalorder %s87, %s90
    %p99 = scmp.eq.s32.totalorder %s14, 1
    %p100 = por %p98, %p99
    %p101 = scmp.ne.s32.totalorder %s90, %s91
    %p102 = scmp.eq.s32.totalorder %s14, 0
    %p103 = por %p101, %p102
    %p104 = scmp.ne.s32.totalorder %s90, %s91
    %p105 = scmp.eq.s32.totalorder %s15, 1
    %p106 = por %p104, %p105
    %p108 = scmp.ne.s32.totalorder %s91, %s107
    %p109 = scmp.eq.s32.totalorder %s15, 0
    %p110 = por %p108, %p109
    %p111 = scmp.le.s32.totalorder 1, %s9
    %p112 = scmp.lt.s32.totalorder %s9, 3
    %p113 = pnand %p111, %p112
    %p114 = pneg %p113
    // Predicated region
    $region9: #{tpu_custom_call.1} parent=5 // pred_check
      _
    $region10: #{tpu_custom_call.1} parent=5 // pred_check_branch
      %116 = sbr.rel (%p113) target = $region12
    $region11: #{tpu_custom_call.1} parent=5 // pred_region
      %s117 = ssub.s32 %s9, 1
      // Predicated region
      $region13: #{tpu_custom_call.1} parent=11 // pred_check
        %p118 = pneg %p56
      $region14: #{tpu_custom_call.1} parent=11 // pred_check_branch
        %120 = sbr.rel (%p118) target = $region16
      $region15: #{tpu_custom_call.1} parent=11 // pred_region
        _
      $region16: #{tpu_custom_call.1} parent=11 // pred_fallthru
        _
      // Predicated region
      $region17: #{tpu_custom_call.1} parent=11 // pred_check
        %p121 = pneg %p77
      $region18: #{tpu_custom_call.1} parent=11 // pred_check_branch
        %123 = sbr.rel (%p121) target = $region20
      $region19: #{tpu_custom_call.1} parent=11 // pred_region
        _
      $region20: #{tpu_custom_call.1} parent=11 // pred_fallthru
        _
    $region12: #{tpu_custom_call.1} parent=5 // pred_fallthru
      _
    %p124 = scmp.lt.s32.totalorder %s9, 2
    // Predicated region
    $region21: #{tpu_custom_call.1} parent=5 // pred_check
      %p125 = pneg %p124
    $region22: #{tpu_custom_call.1} parent=5 // pred_check_branch
      %127 = sbr.rel (%p125) target = $region24
    $region23: #{tpu_custom_call.1} parent=5 // pred_region
      // Predicated region
      $region25: #{tpu_custom_call.1} parent=23 // pred_check
        %p128 = pneg %p29
      $region26: #{tpu_custom_call.1} parent=23 // pred_check_branch
        %130 = sbr.rel (%p128) target = $region28
      $region27: #{tpu_custom_call.1} parent=23 // pred_region
        %p131 = scmp.lt.s32.totalorder %s9, 1
        %s132 = scalar_select %p131, %s9, 1
        %s133 = smul.addr %s132, 32
        %s134 = smul.addr %s133, 8
        %s135 = scalar_lea.vmem %s0, %s134
      $region28: #{tpu_custom_call.1} parent=23 // pred_fallthru
        _
    $region24: #{tpu_custom_call.1} parent=5 // pred_fallthru
      _
    %p136 = scmp.le.s32.totalorder 1, %s9
    %p137 = scmp.lt.s32.totalorder %s9, 3
    %p138 = pnand %p136, %p137
    %p139 = pneg %p138
    // Predicated region
    $region29: #{tpu_custom_call.1} parent=5 // pred_check
      _
    $region30: #{tpu_custom_call.1} parent=5 // pred_check_branch
      %141 = sbr.rel (%p138) target = $region32
    $region31: #{tpu_custom_call.1} parent=5 // pred_region
      %s142 = ssub.s32 %s9, 1
      %p143 = scmp.lt.s32.totalorder %s14, 1
      %s144 = scalar_select %p143, %s14, 1
      %s145 = smul.addr %s144, 32
      %s146 = smul.addr %s145, 8
      %s147 = scalar_lea.vmem %s0, %s146
      %p148 = pneg %p35
      %p149 = pneg %p32
      %p150 = pneg %p56
      %p151 = pneg %p53
      %p152 = pneg %p77
      %p153 = pneg %p74
      %p154 = pneg %p103
      %p155 = pneg %p100
      %p156 = scmp.lt.s32.totalorder %s14, 1
      %s157 = scalar_select %p156, %s14, 1
      %s158 = smul.addr %s157, 28
      %s159 = smul.addr %s158, 8
      %s160 = scalar_lea.vmem %s3, %s159
      %p161 = scmp.lt.s32.totalorder %s14, 1
      %s162 = scalar_select %p161, %s14, 1
      %s163 = smul.addr %s162, 32
      %s164 = smul.addr %s163, 8
      %s165 = scalar_lea.vmem %s0, %s164
      %p166 = scmp.lt.s32.totalorder %s14, 1
      %s167 = scalar_select %p166, %s14, 1
      %s168 = smul.addr %s167, 28
      %s169 = smul.addr %s168, 8
      %s170 = scalar_lea.vmem %s3, %s169
      %v171 = vld [vmem:[%s165] sm:$0xff]
      %v172 = vld [vmem:[%s165 + $0x8] sm:$0xff]
      %v173 = vld [vmem:[%s165 + $0x10] sm:$0xff]
      %v174 = vld [vmem:[%s165 + $0x18] sm:$0xff]
      %v175 = vld [vmem:[%s165 + $0x20] sm:$0xff]
      %v176 = vld [vmem:[%s165 + $0x28] sm:$0xff]
      %v177 = vld [vmem:[%s165 + $0x30] sm:$0xff]
      %v178 = vld [vmem:[%s165 + $0x38] sm:$0xff]
      %v179 = vld [vmem:[%s165 + $0x40] sm:$0xff]
      %v180 = vld [vmem:[%s165 + $0x48] sm:$0xff]
      %v181 = vld [vmem:[%s165 + $0x50] sm:$0xff]
      %v182 = vld [vmem:[%s165 + $0x58] sm:$0xff]
      %v183 = vld [vmem:[%s165 + $0x60] sm:$0xff]
      %v184 = vld [vmem:[%s165 + $0x68] sm:$0xff]
      %v185 = vld [vmem:[%s165 + $0x70] sm:$0xff]
      %v186 = vld [vmem:[%s165 + $0x78] sm:$0xff]
      %v187 = vld [vmem:[%s165 + $0x80] sm:$0xff]
      %v188 = vld [vmem:[%s165 + $0x88] sm:$0xff]
      %v189 = vld [vmem:[%s165 + $0x90] sm:$0xff]
      %v190 = vld [vmem:[%s165 + $0x98] sm:$0xff]
      %v191 = vld [vmem:[%s165 + $0xa0] sm:$0xff]
      %v192 = vld [vmem:[%s165 + $0xa8] sm:$0xff]
      %v193 = vld [vmem:[%s165 + $0xb0] sm:$0xff]
      %v194 = vld [vmem:[%s165 + $0xb8] sm:$0xff]
      %v195 = vld [vmem:[%s165 + $0xc0] sm:$0xff]
      %v196 = vld [vmem:[%s165 + $0xc8] sm:$0xff]
      %v197 = vld [vmem:[%s165 + $0xd0] sm:$0xff]
      %v198 = vld [vmem:[%s165 + $0xd8] sm:$0xff]
      %v199 = vld [vmem:[%s165 + $0xe0] sm:$0xff]
      %v200 = vld [vmem:[%s165 + $0xe8] sm:$0xff]
      %v201 = vld [vmem:[%s165 + $0xf0] sm:$0xff]
      %v202 = vld [vmem:[%s165 + $0xf8] sm:$0xff]
      %vm231 = vcmask 1046528
      %v232 = vrot.slane %v171, 1
      %v233 = vrot.slane %v172, 1
      %v234 = vsel %vm231, %v232, %v233
      %v235 = vrot.slane %v173, 1
      %v236 = vrot.slane %v174, 1
      %v237 = vsel %vm231, %v235, %v236
      %v238 = vrot.slane %v175, 1
      %v239 = vrot.slane %v176, 1
      %v240 = vsel %vm231, %v238, %v239
      %v241 = vrot.slane %v177, 1
      %v242 = vrot.slane %v178, 1
      %v243 = vsel %vm231, %v241, %v242
      %v244 = vrot.slane %v179, 1
      %v245 = vrot.slane %v180, 1
      %v246 = vsel %vm231, %v244, %v245
      %v247 = vrot.slane %v181, 1
      %v248 = vrot.slane %v182, 1
      %v249 = vsel %vm231, %v247, %v248
      %v250 = vrot.slane %v183, 1
      %v251 = vrot.slane %v184, 1
      %v252 = vsel %vm231, %v250, %v251
      %v253 = vrot.slane %v185, 1
      %v254 = vrot.slane %v186, 1
      %v255 = vsel %vm231, %v253, %v254
      %v256 = vrot.slane %v187, 1
      %v257 = vrot.slane %v188, 1
      %v258 = vsel %vm231, %v256, %v257
      %v259 = vrot.slane %v189, 1
      %v260 = vrot.slane %v190, 1
      %v261 = vsel %vm231, %v259, %v260
      %v262 = vrot.slane %v191, 1
      %v263 = vrot.slane %v192, 1
      %v264 = vsel %vm231, %v262, %v263
      %v265 = vrot.slane %v193, 1
      %v266 = vrot.slane %v194, 1
      %v267 = vsel %vm231, %v265, %v266
      %v268 = vrot.slane %v195, 1
      %v269 = vrot.slane %v196, 1
      %v270 = vsel %vm231, %v268, %v269
      %v271 = vrot.slane %v197, 1
      %v272 = vrot.slane %v198, 1
      %v273 = vsel %vm231, %v271, %v272
      %274 = vrot.lane.b32.xlu0 %v234, 4
      %v275 = vpop.permute.xlu0 %274
      %276 = vrot.lane.b32.xlu0 %v233, 4
      %v277 = vpop.permute.xlu0 %276
      %278 = vrot.lane.b32.xlu0 %v237, 4
      %v279 = vpop.permute.xlu0 %278
      %280 = vrot.lane.b32.xlu0 %v236, 4
      %v281 = vpop.permute.xlu0 %280
      %282 = vrot.lane.b32.xlu0 %v240, 4
      %v283 = vpop.permute.xlu0 %282
      %284 = vrot.lane.b32.xlu0 %v239, 4
      %v285 = vpop.permute.xlu0 %284
      %286 = vrot.lane.b32.xlu0 %v243, 4
      %v287 = vpop.permute.xlu0 %286
      %288 = vrot.lane.b32.xlu0 %v242, 4
      %v289 = vpop.permute.xlu0 %288
      %290 = vrot.lane.b32.xlu0 %v246, 4
      %v291 = vpop.permute.xlu0 %290
      %292 = vrot.lane.b32.xlu0 %v245, 4
      %v293 = vpop.permute.xlu0 %292
      %294 = vrot.lane.b32.xlu0 %v249, 4
      %v295 = vpop.permute.xlu0 %294
      %296 = vrot.lane.b32.xlu0 %v248, 4
      %v297 = vpop.permute.xlu0 %296
      %298 = vrot.lane.b32.xlu0 %v252, 4
      %v299 = vpop.permute.xlu0 %298
      %300 = vrot.lane.b32.xlu0 %v251, 4
      %v301 = vpop.permute.xlu0 %300
      %302 = vrot.lane.b32.xlu0 %v255, 4
      %v303 = vpop.permute.xlu0 %302
      %304 = vrot.lane.b32.xlu0 %v254, 4
      %v305 = vpop.permute.xlu0 %304
      %306 = vrot.lane.b32.xlu0 %v258, 4
      %v307 = vpop.permute.xlu0 %306
      %308 = vrot.lane.b32.xlu0 %v257, 4
      %v309 = vpop.permute.xlu0 %308
      %310 = vrot.lane.b32.xlu0 %v261, 4
      %v311 = vpop.permute.xlu0 %310
      %312 = vrot.lane.b32.xlu0 %v260, 4
      %v313 = vpop.permute.xlu0 %312
      %314 = vrot.lane.b32.xlu0 %v264, 4
      %v315 = vpop.permute.xlu0 %314
      %316 = vrot.lane.b32.xlu0 %v263, 4
      %v317 = vpop.permute.xlu0 %316
      %318 = vrot.lane.b32.xlu0 %v267, 4
      %v319 = vpop.permute.xlu0 %318
      %320 = vrot.lane.b32.xlu0 %v266, 4
      %v321 = vpop.permute.xlu0 %320
      %322 = vrot.lane.b32.xlu0 %v270, 4
      %v323 = vpop.permute.xlu0 %322
      %324 = vrot.lane.b32.xlu0 %v269, 4
      %v325 = vpop.permute.xlu0 %324
      %326 = vrot.lane.b32.xlu0 %v273, 4
      %v327 = vpop.permute.xlu0 %326
      %328 = vrot.lane.b32.xlu0 %v272, 4
      %v329 = vpop.permute.xlu0 %328
      %vm358 = vcmask 1045504
      %v359 = vrot.slane %v171, 2
      %v360 = vrot.slane %v172, 2
      %v361 = vsel %vm358, %v359, %v360
      %v362 = vrot.slane %v173, 2
      %v363 = vrot.slane %v174, 2
      %v364 = vsel %vm358, %v362, %v363
      %v365 = vrot.slane %v175, 2
      %v366 = vrot.slane %v176, 2
      %v367 = vsel %vm358, %v365, %v366
      %v368 = vrot.slane %v177, 2
      %v369 = vrot.slane %v178, 2
      %v370 = vsel %vm358, %v368, %v369
      %v371 = vrot.slane %v179, 2
      %v372 = vrot.slane %v180, 2
      %v373 = vsel %vm358, %v371, %v372
      %v374 = vrot.slane %v181, 2
      %v375 = vrot.slane %v182, 2
      %v376 = vsel %vm358, %v374, %v375
      %v377 = vrot.slane %v183, 2
      %v378 = vrot.slane %v184, 2
      %v379 = vsel %vm358, %v377, %v378
      %v380 = vrot.slane %v185, 2
      %v381 = vrot.slane %v186, 2
      %v382 = vsel %vm358, %v380, %v381
      %v383 = vrot.slane %v187, 2
      %v384 = vrot.slane %v188, 2
      %v385 = vsel %vm358, %v383, %v384
      %v386 = vrot.slane %v189, 2
      %v387 = vrot.slane %v190, 2
      %v388 = vsel %vm358, %v386, %v387
      %v389 = vrot.slane %v191, 2
      %v390 = vrot.slane %v192, 2
      %v391 = vsel %vm358, %v389, %v390
      %v392 = vrot.slane %v193, 2
      %v393 = vrot.slane %v194, 2
      %v394 = vsel %vm358, %v392, %v393
      %v395 = vrot.slane %v195, 2
      %v396 = vrot.slane %v196, 2
      %v397 = vsel %vm358, %v395, %v396
      %v398 = vrot.slane %v197, 2
      %v399 = vrot.slane %v198, 2
      %v400 = vsel %vm358, %v398, %v399
      %401 = vrot.lane.b32.xlu0 %v361, 8
      %v402 = vpop.permute.xlu0 %401
      %403 = vrot.lane.b32.xlu0 %v360, 8
      %v404 = vpop.permute.xlu0 %403
      %405 = vrot.lane.b32.xlu0 %v364, 8
      %v406 = vpop.permute.xlu0 %405
      %407 = vrot.lane.b32.xlu0 %v363, 8
      %v408 = vpop.permute.xlu0 %407
      %409 = vrot.lane.b32.xlu0 %v367, 8
      %v410 = vpop.permute.xlu0 %409
      %411 = vrot.lane.b32.xlu0 %v366, 8
      %v412 = vpop.permute.xlu0 %411
      %413 = vrot.lane.b32.xlu0 %v370, 8
      %v414 = vpop.permute.xlu0 %413
      %415 = vrot.lane.b32.xlu0 %v369, 8
      %v416 = vpop.permute.xlu0 %415
      %417 = vrot.lane.b32.xlu0 %v373, 8
      %v418 = vpop.permute.xlu0 %417
      %419 = vrot.lane.b32.xlu0 %v372, 8
      %v420 = vpop.permute.xlu0 %419
      %421 = vrot.lane.b32.xlu0 %v376, 8
      %v422 = vpop.permute.xlu0 %421
      %423 = vrot.lane.b32.xlu0 %v375, 8
      %v424 = vpop.permute.xlu0 %423
      %425 = vrot.lane.b32.xlu0 %v379, 8
      %v426 = vpop.permute.xlu0 %425
      %427 = vrot.lane.b32.xlu0 %v378, 8
      %v428 = vpop.permute.xlu0 %427
      %429 = vrot.lane.b32.xlu0 %v382, 8
      %v430 = vpop.permute.xlu0 %429
      %431 = vrot.lane.b32.xlu0 %v381, 8
      %v432 = vpop.permute.xlu0 %431
      %433 = vrot.lane.b32.xlu0 %v385, 8
      %v434 = vpop.permute.xlu0 %433
      %435 = vrot.lane.b32.xlu0 %v384, 8
      %v436 = vpop.permute.xlu0 %435
      %437 = vrot.lane.b32.xlu0 %v388, 8
      %v438 = vpop.permute.xlu0 %437
      %439 = vrot.lane.b32.xlu0 %v387, 8
      %v440 = vpop.permute.xlu0 %439
      %441 = vrot.lane.b32.xlu0 %v391, 8
      %v442 = vpop.permute.xlu0 %441
      %443 = vrot.lane.b32.xlu0 %v390, 8
      %v444 = vpop.permute.xlu0 %443
      %445 = vrot.lane.b32.xlu0 %v394, 8
      %v446 = vpop.permute.xlu0 %445
      %447 = vrot.lane.b32.xlu0 %v393, 8
      %v448 = vpop.permute.xlu0 %447
      %449 = vrot.lane.b32.xlu0 %v397, 8
      %v450 = vpop.permute.xlu0 %449
      %451 = vrot.lane.b32.xlu0 %v396, 8
      %v452 = vpop.permute.xlu0 %451
      %453 = vrot.lane.b32.xlu0 %v400, 8
      %v454 = vpop.permute.xlu0 %453
      %455 = vrot.lane.b32.xlu0 %v399, 8
      %v456 = vpop.permute.xlu0 %455
      %487 = vrot.lane.b32.xlu0 %v173, 12
      %v488 = vpop.permute.xlu0 %487
      %489 = vrot.lane.b32.xlu0 %v174, 12
      %v490 = vpop.permute.xlu0 %489
      %491 = vrot.lane.b32.xlu0 %v175, 12
      %v492 = vpop.permute.xlu0 %491
      %493 = vrot.lane.b32.xlu0 %v176, 12
      %v494 = vpop.permute.xlu0 %493
      %495 = vrot.lane.b32.xlu0 %v177, 12
      %v496 = vpop.permute.xlu0 %495
      %497 = vrot.lane.b32.xlu0 %v178, 12
      %v498 = vpop.permute.xlu0 %497
      %499 = vrot.lane.b32.xlu0 %v179, 12
      %v500 = vpop.permute.xlu0 %499
      %501 = vrot.lane.b32.xlu0 %v180, 12
      %v502 = vpop.permute.xlu0 %501
      %503 = vrot.lane.b32.xlu0 %v181, 12
      %v504 = vpop.permute.xlu0 %503
      %505 = vrot.lane.b32.xlu0 %v182, 12
      %v506 = vpop.permute.xlu0 %505
      %507 = vrot.lane.b32.xlu0 %v183, 12
      %v508 = vpop.permute.xlu0 %507
      %509 = vrot.lane.b32.xlu0 %v184, 12
      %v510 = vpop.permute.xlu0 %509
      %511 = vrot.lane.b32.xlu0 %v185, 12
      %v512 = vpop.permute.xlu0 %511
      %513 = vrot.lane.b32.xlu0 %v186, 12
      %v514 = vpop.permute.xlu0 %513
      %515 = vrot.lane.b32.xlu0 %v187, 12
      %v516 = vpop.permute.xlu0 %515
      %517 = vrot.lane.b32.xlu0 %v188, 12
      %v518 = vpop.permute.xlu0 %517
      %519 = vrot.lane.b32.xlu0 %v189, 12
      %v520 = vpop.permute.xlu0 %519
      %521 = vrot.lane.b32.xlu0 %v190, 12
      %v522 = vpop.permute.xlu0 %521
      %523 = vrot.lane.b32.xlu0 %v191, 12
      %v524 = vpop.permute.xlu0 %523
      %525 = vrot.lane.b32.xlu0 %v192, 12
      %v526 = vpop.permute.xlu0 %525
      %527 = vrot.lane.b32.xlu0 %v193, 12
      %v528 = vpop.permute.xlu0 %527
      %529 = vrot.lane.b32.xlu0 %v194, 12
      %v530 = vpop.permute.xlu0 %529
      %531 = vrot.lane.b32.xlu0 %v195, 12
      %v532 = vpop.permute.xlu0 %531
      %533 = vrot.lane.b32.xlu0 %v196, 12
      %v534 = vpop.permute.xlu0 %533
      %535 = vrot.lane.b32.xlu0 %v197, 12
      %v536 = vpop.permute.xlu0 %535
      %537 = vrot.lane.b32.xlu0 %v198, 12
      %v538 = vpop.permute.xlu0 %537
      %539 = vrot.lane.b32.xlu0 %v199, 12
      %v540 = vpop.permute.xlu0 %539
      %541 = vrot.lane.b32.xlu0 %v200, 12
      %v542 = vpop.permute.xlu0 %541
      %v571 = vrot.slane %v199, 1
      %v572 = vrot.slane %v200, 1
      %v573 = vsel %vm231, %v571, %v572
      %574 = vrot.lane.b32.xlu0 %v237, 16
      %v575 = vpop.permute.xlu0 %574
      %576 = vrot.lane.b32.xlu0 %v236, 16
      %v577 = vpop.permute.xlu0 %576
      %578 = vrot.lane.b32.xlu0 %v240, 16
      %v579 = vpop.permute.xlu0 %578
      %580 = vrot.lane.b32.xlu0 %v239, 16
      %v581 = vpop.permute.xlu0 %580
      %582 = vrot.lane.b32.xlu0 %v243, 16
      %v583 = vpop.permute.xlu0 %582
      %584 = vrot.lane.b32.xlu0 %v242, 16
      %v585 = vpop.permute.xlu0 %584
      %586 = vrot.lane.b32.xlu0 %v246, 16
      %v587 = vpop.permute.xlu0 %586
      %588 = vrot.lane.b32.xlu0 %v245, 16
      %v589 = vpop.permute.xlu0 %588
      %590 = vrot.lane.b32.xlu0 %v249, 16
      %v591 = vpop.permute.xlu0 %590
      %592 = vrot.lane.b32.xlu0 %v248, 16
      %v593 = vpop.permute.xlu0 %592
      %594 = vrot.lane.b32.xlu0 %v252, 16
      %v595 = vpop.permute.xlu0 %594
      %596 = vrot.lane.b32.xlu0 %v251, 16
      %v597 = vpop.permute.xlu0 %596
      %598 = vrot.lane.b32.xlu0 %v255, 16
      %v599 = vpop.permute.xlu0 %598
      %600 = vrot.lane.b32.xlu0 %v254, 16
      %v601 = vpop.permute.xlu0 %600
      %602 = vrot.lane.b32.xlu0 %v258, 16
      %v603 = vpop.permute.xlu0 %602
      %604 = vrot.lane.b32.xlu0 %v257, 16
      %v605 = vpop.permute.xlu0 %604
      %606 = vrot.lane.b32.xlu0 %v261, 16
      %v607 = vpop.permute.xlu0 %606
      %608 = vrot.lane.b32.xlu0 %v260, 16
      %v609 = vpop.permute.xlu0 %608
      %610 = vrot.lane.b32.xlu0 %v264, 16
      %v611 = vpop.permute.xlu0 %610
      %612 = vrot.lane.b32.xlu0 %v263, 16
      %v613 = vpop.permute.xlu0 %612
      %614 = vrot.lane.b32.xlu0 %v267, 16
      %v615 = vpop.permute.xlu0 %614
      %616 = vrot.lane.b32.xlu0 %v266, 16
      %v617 = vpop.permute.xlu0 %616
      %618 = vrot.lane.b32.xlu0 %v270, 16
      %v619 = vpop.permute.xlu0 %618
      %620 = vrot.lane.b32.xlu0 %v269, 16
      %v621 = vpop.permute.xlu0 %620
      %622 = vrot.lane.b32.xlu0 %v273, 16
      %v623 = vpop.permute.xlu0 %622
      %624 = vrot.lane.b32.xlu0 %v272, 16
      %v625 = vpop.permute.xlu0 %624
      %626 = vrot.lane.b32.xlu0 %v573, 16
      %v627 = vpop.permute.xlu0 %626
      %628 = vrot.lane.b32.xlu0 %v572, 16
      %v629 = vpop.permute.xlu0 %628
      %v658 = vrot.slane %v199, 2
      %v659 = vrot.slane %v200, 2
      %v660 = vsel %vm358, %v658, %v659
      %661 = vrot.lane.b32.xlu0 %v364, 20
      %v662 = vpop.permute.xlu0 %661
      %663 = vrot.lane.b32.xlu0 %v363, 20
      %v664 = vpop.permute.xlu0 %663
      %665 = vrot.lane.b32.xlu0 %v367, 20
      %v666 = vpop.permute.xlu0 %665
      %667 = vrot.lane.b32.xlu0 %v366, 20
      %v668 = vpop.permute.xlu0 %667
      %669 = vrot.lane.b32.xlu0 %v370, 20
      %v670 = vpop.permute.xlu0 %669
      %671 = vrot.lane.b32.xlu0 %v369, 20
      %v672 = vpop.permute.xlu0 %671
      %673 = vrot.lane.b32.xlu0 %v373, 20
      %v674 = vpop.permute.xlu0 %673
      %675 = vrot.lane.b32.xlu0 %v372, 20
      %v676 = vpop.permute.xlu0 %675
      %677 = vrot.lane.b32.xlu0 %v376, 20
      %v678 = vpop.permute.xlu0 %677
      %679 = vrot.lane.b32.xlu0 %v375, 20
      %v680 = vpop.permute.xlu0 %679
      %681 = vrot.lane.b32.xlu0 %v379, 20
      %v682 = vpop.permute.xlu0 %681
      %683 = vrot.lane.b32.xlu0 %v378, 20
      %v684 = vpop.permute.xlu0 %683
      %685 = vrot.lane.b32.xlu0 %v382, 20
      %v686 = vpop.permute.xlu0 %685
      %687 = vrot.lane.b32.xlu0 %v381, 20
      %v688 = vpop.permute.xlu0 %687
      %689 = vrot.lane.b32.xlu0 %v385, 20
      %v690 = vpop.permute.xlu0 %689
      %691 = vrot.lane.b32.xlu0 %v384, 20
      %v692 = vpop.permute.xlu0 %691
      %693 = vrot.lane.b32.xlu0 %v388, 20
      %v694 = vpop.permute.xlu0 %693
      %695 = vrot.lane.b32.xlu0 %v387, 20
      %v696 = vpop.permute.xlu0 %695
      %697 = vrot.lane.b32.xlu0 %v391, 20
      %v698 = vpop.permute.xlu0 %697
      %699 = vrot.lane.b32.xlu0 %v390, 20
      %v700 = vpop.permute.xlu0 %699
      %701 = vrot.lane.b32.xlu0 %v394, 20
      %v702 = vpop.permute.xlu0 %701
      %703 = vrot.lane.b32.xlu0 %v393, 20
      %v704 = vpop.permute.xlu0 %703
      %705 = vrot.lane.b32.xlu0 %v397, 20
      %v706 = vpop.permute.xlu0 %705
      %707 = vrot.lane.b32.xlu0 %v396, 20
      %v708 = vpop.permute.xlu0 %707
      %709 = vrot.lane.b32.xlu0 %v400, 20
      %v710 = vpop.permute.xlu0 %709
      %711 = vrot.lane.b32.xlu0 %v399, 20
      %v712 = vpop.permute.xlu0 %711
      %713 = vrot.lane.b32.xlu0 %v660, 20
      %v714 = vpop.permute.xlu0 %713
      %715 = vrot.lane.b32.xlu0 %v659, 20
      %v716 = vpop.permute.xlu0 %715
      %747 = vrot.lane.b32.xlu0 %v175, 24
      %v748 = vpop.permute.xlu0 %747
      %749 = vrot.lane.b32.xlu0 %v176, 24
      %v750 = vpop.permute.xlu0 %749
      %751 = vrot.lane.b32.xlu0 %v177, 24
      %v752 = vpop.permute.xlu0 %751
      %753 = vrot.lane.b32.xlu0 %v178, 24
      %v754 = vpop.permute.xlu0 %753
      %755 = vrot.lane.b32.xlu0 %v179, 24
      %v756 = vpop.permute.xlu0 %755
      %757 = vrot.lane.b32.xlu0 %v180, 24
      %v758 = vpop.permute.xlu0 %757
      %759 = vrot.lane.b32.xlu0 %v181, 24
      %v760 = vpop.permute.xlu0 %759
      %761 = vrot.lane.b32.xlu0 %v182, 24
      %v762 = vpop.permute.xlu0 %761
      %763 = vrot.lane.b32.xlu0 %v183, 24
      %v764 = vpop.permute.xlu0 %763
      %765 = vrot.lane.b32.xlu0 %v184, 24
      %v766 = vpop.permute.xlu0 %765
      %767 = vrot.lane.b32.xlu0 %v185, 24
      %v768 = vpop.permute.xlu0 %767
      %769 = vrot.lane.b32.xlu0 %v186, 24
      %v770 = vpop.permute.xlu0 %769
      %771 = vrot.lane.b32.xlu0 %v187, 24
      %v772 = vpop.permute.xlu0 %771
      %773 = vrot.lane.b32.xlu0 %v188, 24
      %v774 = vpop.permute.xlu0 %773
      %775 = vrot.lane.b32.xlu0 %v189, 24
      %v776 = vpop.permute.xlu0 %775
      %777 = vrot.lane.b32.xlu0 %v190, 24
      %v778 = vpop.permute.xlu0 %777
      %779 = vrot.lane.b32.xlu0 %v191, 24
      %v780 = vpop.permute.xlu0 %779
      %781 = vrot.lane.b32.xlu0 %v192, 24
      %v782 = vpop.permute.xlu0 %781
      %783 = vrot.lane.b32.xlu0 %v193, 24
      %v784 = vpop.permute.xlu0 %783
      %785 = vrot.lane.b32.xlu0 %v194, 24
      %v786 = vpop.permute.xlu0 %785
      %787 = vrot.lane.b32.xlu0 %v195, 24
      %v788 = vpop.permute.xlu0 %787
      %789 = vrot.lane.b32.xlu0 %v196, 24
      %v790 = vpop.permute.xlu0 %789
      %791 = vrot.lane.b32.xlu0 %v197, 24
      %v792 = vpop.permute.xlu0 %791
      %793 = vrot.lane.b32.xlu0 %v198, 24
      %v794 = vpop.permute.xlu0 %793
      %795 = vrot.lane.b32.xlu0 %v199, 24
      %v796 = vpop.permute.xlu0 %795
      %797 = vrot.lane.b32.xlu0 %v200, 24
      %v798 = vpop.permute.xlu0 %797
      %799 = vrot.lane.b32.xlu0 %v201, 24
      %v800 = vpop.permute.xlu0 %799
      %801 = vrot.lane.b32.xlu0 %v202, 24
      %v802 = vpop.permute.xlu0 %801
      %v831 = vrot.slane %v201, 1
      %v832 = vrot.slane %v202, 1
      %v833 = vsel %vm231, %v831, %v832
      %834 = vrot.lane.b32.xlu0 %v240, 28
      %v835 = vpop.permute.xlu0 %834
      %836 = vrot.lane.b32.xlu0 %v239, 28
      %v837 = vpop.permute.xlu0 %836
      %838 = vrot.lane.b32.xlu0 %v243, 28
      %v839 = vpop.permute.xlu0 %838
      %840 = vrot.lane.b32.xlu0 %v242, 28
      %v841 = vpop.permute.xlu0 %840
      %842 = vrot.lane.b32.xlu0 %v246, 28
      %v843 = vpop.permute.xlu0 %842
      %844 = vrot.lane.b32.xlu0 %v245, 28
      %v845 = vpop.permute.xlu0 %844
      %846 = vrot.lane.b32.xlu0 %v249, 28
      %v847 = vpop.permute.xlu0 %846
      %848 = vrot.lane.b32.xlu0 %v248, 28
      %v849 = vpop.permute.xlu0 %848
      %850 = vrot.lane.b32.xlu0 %v252, 28
      %v851 = vpop.permute.xlu0 %850
      %852 = vrot.lane.b32.xlu0 %v251, 28
      %v853 = vpop.permute.xlu0 %852
      %854 = vrot.lane.b32.xlu0 %v255, 28
      %v855 = vpop.permute.xlu0 %854
      %856 = vrot.lane.b32.xlu0 %v254, 28
      %v857 = vpop.permute.xlu0 %856
      %858 = vrot.lane.b32.xlu0 %v258, 28
      %v859 = vpop.permute.xlu0 %858
      %860 = vrot.lane.b32.xlu0 %v257, 28
      %v861 = vpop.permute.xlu0 %860
      %862 = vrot.lane.b32.xlu0 %v261, 28
      %v863 = vpop.permute.xlu0 %862
      %864 = vrot.lane.b32.xlu0 %v260, 28
      %v865 = vpop.permute.xlu0 %864
      %866 = vrot.lane.b32.xlu0 %v264, 28
      %v867 = vpop.permute.xlu0 %866
      %868 = vrot.lane.b32.xlu0 %v263, 28
      %v869 = vpop.permute.xlu0 %868
      %870 = vrot.lane.b32.xlu0 %v267, 28
      %v871 = vpop.permute.xlu0 %870
      %872 = vrot.lane.b32.xlu0 %v266, 28
      %v873 = vpop.permute.xlu0 %872
      %874 = vrot.lane.b32.xlu0 %v270, 28
      %v875 = vpop.permute.xlu0 %874
      %876 = vrot.lane.b32.xlu0 %v269, 28
      %v877 = vpop.permute.xlu0 %876
      %878 = vrot.lane.b32.xlu0 %v273, 28
      %v879 = vpop.permute.xlu0 %878
      %880 = vrot.lane.b32.xlu0 %v272, 28
      %v881 = vpop.permute.xlu0 %880
      %882 = vrot.lane.b32.xlu0 %v573, 28
      %v883 = vpop.permute.xlu0 %882
      %884 = vrot.lane.b32.xlu0 %v572, 28
      %v885 = vpop.permute.xlu0 %884
      %886 = vrot.lane.b32.xlu0 %v833, 28
      %v887 = vpop.permute.xlu0 %886
      %888 = vrot.lane.b32.xlu0 %v832, 28
      %v889 = vpop.permute.xlu0 %888
      %v918 = vrot.slane %v201, 2
      %v919 = vrot.slane %v202, 2
      %v920 = vsel %vm358, %v918, %v919
      %921 = vrot.lane.b32.xlu0 %v367, 32
      %v922 = vpop.permute.xlu0 %921
      %923 = vrot.lane.b32.xlu0 %v366, 32
      %v924 = vpop.permute.xlu0 %923
      %925 = vrot.lane.b32.xlu0 %v370, 32
      %v926 = vpop.permute.xlu0 %925
      %927 = vrot.lane.b32.xlu0 %v369, 32
      %v928 = vpop.permute.xlu0 %927
      %929 = vrot.lane.b32.xlu0 %v373, 32
      %v930 = vpop.permute.xlu0 %929
      %931 = vrot.lane.b32.xlu0 %v372, 32
      %v932 = vpop.permute.xlu0 %931
      %933 = vrot.lane.b32.xlu0 %v376, 32
      %v934 = vpop.permute.xlu0 %933
      %935 = vrot.lane.b32.xlu0 %v375, 32
      %v936 = vpop.permute.xlu0 %935
      %937 = vrot.lane.b32.xlu0 %v379, 32
      %v938 = vpop.permute.xlu0 %937
      %939 = vrot.lane.b32.xlu0 %v378, 32
      %v940 = vpop.permute.xlu0 %939
      %941 = vrot.lane.b32.xlu0 %v382, 32
      %v942 = vpop.permute.xlu0 %941
      %943 = vrot.lane.b32.xlu0 %v381, 32
      %v944 = vpop.permute.xlu0 %943
      %945 = vrot.lane.b32.xlu0 %v385, 32
      %v946 = vpop.permute.xlu0 %945
      %947 = vrot.lane.b32.xlu0 %v384, 32
      %v948 = vpop.permute.xlu0 %947
      %949 = vrot.lane.b32.xlu0 %v388, 32
      %v950 = vpop.permute.xlu0 %949
      %951 = vrot.lane.b32.xlu0 %v387, 32
      %v952 = vpop.permute.xlu0 %951
      %953 = vrot.lane.b32.xlu0 %v391, 32
      %v954 = vpop.permute.xlu0 %953
      %955 = vrot.lane.b32.xlu0 %v390, 32
      %v956 = vpop.permute.xlu0 %955
      %957 = vrot.lane.b32.xlu0 %v394, 32
      %v958 = vpop.permute.xlu0 %957
      %959 = vrot.lane.b32.xlu0 %v393, 32
      %v960 = vpop.permute.xlu0 %959
      %961 = vrot.lane.b32.xlu0 %v397, 32
      %v962 = vpop.permute.xlu0 %961
      %963 = vrot.lane.b32.xlu0 %v396, 32
      %v964 = vpop.permute.xlu0 %963
      %965 = vrot.lane.b32.xlu0 %v400, 32
      %v966 = vpop.permute.xlu0 %965
      %967 = vrot.lane.b32.xlu0 %v399, 32
      %v968 = vpop.permute.xlu0 %967
      %969 = vrot.lane.b32.xlu0 %v660, 32
      %v970 = vpop.permute.xlu0 %969
      %971 = vrot.lane.b32.xlu0 %v659, 32
      %v972 = vpop.permute.xlu0 %971
      %973 = vrot.lane.b32.xlu0 %v920, 32
      %v974 = vpop.permute.xlu0 %973
      %975 = vrot.lane.b32.xlu0 %v919, 32
      %v976 = vpop.permute.xlu0 %975
      %vm1005 = vcmask 31744
      %v1006 = vsel %vm1005, %v171, %v275
      %v1007 = vsel %vm1005, %v172, %v277
      %v1008 = vsel %vm1005, %v173, %v279
      %v1009 = vsel %vm1005, %v174, %v281
      %v1010 = vsel %vm1005, %v175, %v283
      %v1011 = vsel %vm1005, %v176, %v285
      %v1012 = vsel %vm1005, %v177, %v287
      %v1013 = vsel %vm1005, %v178, %v289
      %v1014 = vsel %vm1005, %v179, %v291
      %v1015 = vsel %vm1005, %v180, %v293
      %v1016 = vsel %vm1005, %v181, %v295
      %v1017 = vsel %vm1005, %v182, %v297
      %v1018 = vsel %vm1005, %v183, %v299
      %v1019 = vsel %vm1005, %v184, %v301
      %v1020 = vsel %vm1005, %v185, %v303
      %v1021 = vsel %vm1005, %v186, %v305
      %v1022 = vsel %vm1005, %v187, %v307
      %v1023 = vsel %vm1005, %v188, %v309
      %v1024 = vsel %vm1005, %v189, %v311
      %v1025 = vsel %vm1005, %v190, %v313
      %v1026 = vsel %vm1005, %v191, %v315
      %v1027 = vsel %vm1005, %v192, %v317
      %v1028 = vsel %vm1005, %v193, %v319
      %v1029 = vsel %vm1005, %v194, %v321
      %v1030 = vsel %vm1005, %v195, %v323
      %v1031 = vsel %vm1005, %v196, %v325
      %v1032 = vsel %vm1005, %v197, %v327
      %v1033 = vsel %vm1005, %v198, %v329
      %vm1034 = vcmask 64512
      %v1035 = vsel %vm1034, %v1006, %v402
      %v1036 = vsel %vm1034, %v1007, %v404
      %v1037 = vsel %vm1034, %v1008, %v406
      %v1038 = vsel %vm1034, %v1009, %v408
      %v1039 = vsel %vm1034, %v1010, %v410
      %v1040 = vsel %vm1034, %v1011, %v412
      %v1041 = vsel %vm1034, %v1012, %v414
      %v1042 = vsel %vm1034, %v1013, %v416
      %v1043 = vsel %vm1034, %v1014, %v418
      %v1044 = vsel %vm1034, %v1015, %v420
      %v1045 = vsel %vm1034, %v1016, %v422
      %v1046 = vsel %vm1034, %v1017, %v424
      %v1047 = vsel %vm1034, %v1018, %v426
      %v1048 = vsel %vm1034, %v1019, %v428
      %v1049 = vsel %vm1034, %v1020, %v430
      %v1050 = vsel %vm1034, %v1021, %v432
      %v1051 = vsel %vm1034, %v1022, %v434
      %v1052 = vsel %vm1034, %v1023, %v436
      %v1053 = vsel %vm1034, %v1024, %v438
      %v1054 = vsel %vm1034, %v1025, %v440
      %v1055 = vsel %vm1034, %v1026, %v442
      %v1056 = vsel %vm1034, %v1027, %v444
      %v1057 = vsel %vm1034, %v1028, %v446
      %v1058 = vsel %vm1034, %v1029, %v448
      %v1059 = vsel %vm1034, %v1030, %v450
      %v1060 = vsel %vm1034, %v1031, %v452
      %v1061 = vsel %vm1034, %v1032, %v454
      %v1062 = vsel %vm1034, %v1033, %v456
      %vm1063 = vcmask 97280
      %v1064 = vsel %vm1063, %v1035, %v488
      %v1065 = vsel %vm1063, %v1036, %v490
      %v1066 = vsel %vm1063, %v1037, %v492
      %v1067 = vsel %vm1063, %v1038, %v494
      %v1068 = vsel %vm1063, %v1039, %v496
      %v1069 = vsel %vm1063, %v1040, %v498
      %v1070 = vsel %vm1063, %v1041, %v500
      %v1071 = vsel %vm1063, %v1042, %v502
      %v1072 = vsel %vm1063, %v1043, %v504
      %v1073 = vsel %vm1063, %v1044, %v506
      %v1074 = vsel %vm1063, %v1045, %v508
      %v1075 = vsel %vm1063, %v1046, %v510
      %v1076 = vsel %vm1063, %v1047, %v512
      %v1077 = vsel %vm1063, %v1048, %v514
      %v1078 = vsel %vm1063, %v1049, %v516
      %v1079 = vsel %vm1063, %v1050, %v518
      %v1080 = vsel %vm1063, %v1051, %v520
      %v1081 = vsel %vm1063, %v1052, %v522
      %v1082 = vsel %vm1063, %v1053, %v524
      %v1083 = vsel %vm1063, %v1054, %v526
      %v1084 = vsel %vm1063, %v1055, %v528
      %v1085 = vsel %vm1063, %v1056, %v530
      %v1086 = vsel %vm1063, %v1057, %v532
      %v1087 = vsel %vm1063, %v1058, %v534
      %v1088 = vsel %vm1063, %v1059, %v536
      %v1089 = vsel %vm1063, %v1060, %v538
      %v1090 = vsel %vm1063, %v1061, %v540
      %v1091 = vsel %vm1063, %v1062, %v542
      %vm1092 = vcmask 130048
      %v1093 = vsel %vm1092, %v1064, %v575
      %v1094 = vsel %vm1092, %v1065, %v577
      %v1095 = vsel %vm1092, %v1066, %v579
      %v1096 = vsel %vm1092, %v1067, %v581
      %v1097 = vsel %vm1092, %v1068, %v583
      %v1098 = vsel %vm1092, %v1069, %v585
      %v1099 = vsel %vm1092, %v1070, %v587
      %v1100 = vsel %vm1092, %v1071, %v589
      %v1101 = vsel %vm1092, %v1072, %v591
      %v1102 = vsel %vm1092, %v1073, %v593
      %v1103 = vsel %vm1092, %v1074, %v595
      %v1104 = vsel %vm1092, %v1075, %v597
      %v1105 = vsel %vm1092, %v1076, %v599
      %v1106 = vsel %vm1092, %v1077, %v601
      %v1107 = vsel %vm1092, %v1078, %v603
      %v1108 = vsel %vm1092, %v1079, %v605
      %v1109 = vsel %vm1092, %v1080, %v607
      %v1110 = vsel %vm1092, %v1081, %v609
      %v1111 = vsel %vm1092, %v1082, %v611
      %v1112 = vsel %vm1092, %v1083, %v613
      %v1113 = vsel %vm1092, %v1084, %v615
      %v1114 = vsel %vm1092, %v1085, %v617
      %v1115 = vsel %vm1092, %v1086, %v619
      %v1116 = vsel %vm1092, %v1087, %v621
      %v1117 = vsel %vm1092, %v1088, %v623
      %v1118 = vsel %vm1092, %v1089, %v625
      %v1119 = vsel %vm1092, %v1090, %v627
      %v1120 = vsel %vm1092, %v1091, %v629
      %vm1121 = vcmask 162816
      %v1122 = vsel %vm1121, %v1093, %v662
      %v1123 = vsel %vm1121, %v1094, %v664
      %v1124 = vsel %vm1121, %v1095, %v666
      %v1125 = vsel %vm1121, %v1096, %v668
      %v1126 = vsel %vm1121, %v1097, %v670
      %v1127 = vsel %vm1121, %v1098, %v672
      %v1128 = vsel %vm1121, %v1099, %v674
      %v1129 = vsel %vm1121, %v1100, %v676
      %v1130 = vsel %vm1121, %v1101, %v678
      %v1131 = vsel %vm1121, %v1102, %v680
      %v1132 = vsel %vm1121, %v1103, %v682
      %v1133 = vsel %vm1121, %v1104, %v684
      %v1134 = vsel %vm1121, %v1105, %v686
      %v1135 = vsel %vm1121, %v1106, %v688
      %v1136 = vsel %vm1121, %v1107, %v690
      %v1137 = vsel %vm1121, %v1108, %v692
      %v1138 = vsel %vm1121, %v1109, %v694
      %v1139 = vsel %vm1121, %v1110, %v696
      %v1140 = vsel %vm1121, %v1111, %v698
      %v1141 = vsel %vm1121, %v1112, %v700
      %v1142 = vsel %vm1121, %v1113, %v702
      %v1143 = vsel %vm1121, %v1114, %v704
      %v1144 = vsel %vm1121, %v1115, %v706
      %v1145 = vsel %vm1121, %v1116, %v708
      %v1146 = vsel %vm1121, %v1117, %v710
      %v1147 = vsel %vm1121, %v1118, %v712
      %v1148 = vsel %vm1121, %v1119, %v714
      %v1149 = vsel %vm1121, %v1120, %v716
      %vm1150 = vcmask 195584
      %v1151 = vsel %vm1150, %v1122, %v748
      %v1152 = vsel %vm1150, %v1123, %v750
      %v1153 = vsel %vm1150, %v1124, %v752
      %v1154 = vsel %vm1150, %v1125, %v754
      %v1155 = vsel %vm1150, %v1126, %v756
      %v1156 = vsel %vm1150, %v1127, %v758
      %v1157 = vsel %vm1150, %v1128, %v760
      %v1158 = vsel %vm1150, %v1129, %v762
      %v1159 = vsel %vm1150, %v1130, %v764
      %v1160 = vsel %vm1150, %v1131, %v766
      %v1161 = vsel %vm1150, %v1132, %v768
      %v1162 = vsel %vm1150, %v1133, %v770
      %v1163 = vsel %vm1150, %v1134, %v772
      %v1164 = vsel %vm1150, %v1135, %v774
      %v1165 = vsel %vm1150, %v1136, %v776
      %v1166 = vsel %vm1150, %v1137, %v778
      %v1167 = vsel %vm1150, %v1138, %v780
      %v1168 = vsel %vm1150, %v1139, %v782
      %v1169 = vsel %vm1150, %v1140, %v784
      %v1170 = vsel %vm1150, %v1141, %v786
      %v1171 = vsel %vm1150, %v1142, %v788
      %v1172 = vsel %vm1150, %v1143, %v790
      %v1173 = vsel %vm1150, %v1144, %v792
      %v1174 = vsel %vm1150, %v1145, %v794
      %v1175 = vsel %vm1150, %v1146, %v796
      %v1176 = vsel %vm1150, %v1147, %v798
      %v1177 = vsel %vm1150, %v1148, %v800
      %v1178 = vsel %vm1150, %v1149, %v802
      %vm1179 = vcmask 228352
      %v1180 = vsel %vm1179, %v1151, %v835
      %v1181 = vsel %vm1179, %v1152, %v837
      %v1182 = vsel %vm1179, %v1153, %v839
      %v1183 = vsel %vm1179, %v1154, %v841
      %v1184 = vsel %vm1179, %v1155, %v843
      %v1185 = vsel %vm1179, %v1156, %v845
      %v1186 = vsel %vm1179, %v1157, %v847
      %v1187 = vsel %vm1179, %v1158, %v849
      %v1188 = vsel %vm1179, %v1159, %v851
      %v1189 = vsel %vm1179, %v1160, %v853
      %v1190 = vsel %vm1179, %v1161, %v855
      %v1191 = vsel %vm1179, %v1162, %v857
      %v1192 = vsel %vm1179, %v1163, %v859
      %v1193 = vsel %vm1179, %v1164, %v861
      %v1194 = vsel %vm1179, %v1165, %v863
      %v1195 = vsel %vm1179, %v1166, %v865
      %v1196 = vsel %vm1179, %v1167, %v867
      %v1197 = vsel %vm1179, %v1168, %v869
      %v1198 = vsel %vm1179, %v1169, %v871
      %v1199 = vsel %vm1179, %v1170, %v873
      %v1200 = vsel %vm1179, %v1171, %v875
      %v1201 = vsel %vm1179, %v1172, %v877
      %v1202 = vsel %vm1179, %v1173, %v879
      %v1203 = vsel %vm1179, %v1174, %v881
      %v1204 = vsel %vm1179, %v1175, %v883
      %v1205 = vsel %vm1179, %v1176, %v885
      %v1206 = vsel %vm1179, %v1177, %v887
      %v1207 = vsel %vm1179, %v1178, %v889
      %vm1208 = vcmask 261120
      %v1209 = vsel %vm1208, %v1180, %v922
      %v1210 = vsel %vm1208, %v1181, %v924
      %v1211 = vsel %vm1208, %v1182, %v926
      %v1212 = vsel %vm1208, %v1183, %v928
      %v1213 = vsel %vm1208, %v1184, %v930
      %v1214 = vsel %vm1208, %v1185, %v932
      %v1215 = vsel %vm1208, %v1186, %v934
      %v1216 = vsel %vm1208, %v1187, %v936
      %v1217 = vsel %vm1208, %v1188, %v938
      %v1218 = vsel %vm1208, %v1189, %v940
      %v1219 = vsel %vm1208, %v1190, %v942
      %v1220 = vsel %vm1208, %v1191, %v944
      %v1221 = vsel %vm1208, %v1192, %v946
      %v1222 = vsel %vm1208, %v1193, %v948
      %v1223 = vsel %vm1208, %v1194, %v950
      %v1224 = vsel %vm1208, %v1195, %v952
      %v1225 = vsel %vm1208, %v1196, %v954
      %v1226 = vsel %vm1208, %v1197, %v956
      %v1227 = vsel %vm1208, %v1198, %v958
      %v1228 = vsel %vm1208, %v1199, %v960
      %v1229 = vsel %vm1208, %v1200, %v962
      %v1230 = vsel %vm1208, %v1201, %v964
      %v1231 = vsel %vm1208, %v1202, %v966
      %v1232 = vsel %vm1208, %v1203, %v968
      %v1233 = vsel %vm1208, %v1204, %v970
      %v1234 = vsel %vm1208, %v1205, %v972
      %v1235 = vsel %vm1208, %v1206, %v974
      %v1236 = vsel %vm1208, %v1207, %v976
      %v1265 = vcombine.high %v1209, %v1209
      %v1267 = vunpack.c.l.s4 1983009808
      %v1268 = vunpack.c.0.s8 %v1267
      %v1269 = vlaneseq
      %v1270 = vshrl.u32 %v1269, 7
      %v1271 = vsub.s32 %v1268, %v1270
      %v1272 = vrot.slane %v1209, %v1271
      %v1274 = vunpack.c.l.s4 1983009808
      %v1275 = vunpack.c.0.s8 %v1274
      %v1276 = vlaneseq
      %v1277 = vshrl.u32 %v1276, 7
      %v1278 = vsub.s32 %v1275, %v1277
      %v1279 = vrot.slane %v1265, %v1278
      %v1280 = vcombine.high %v1272, %v1272
      %v1281 = vcombine.high %v1279, %v1279
      %v1282 = vcombine.high %v1210, %v1210
      %v1284 = vunpack.c.l.s4 1983009808
      %v1285 = vunpack.c.0.s8 %v1284
      %v1286 = vlaneseq
      %v1287 = vshrl.u32 %v1286, 7
      %v1288 = vsub.s32 %v1285, %v1287
      %v1289 = vrot.slane %v1210, %v1288
      %v1291 = vunpack.c.l.s4 1983009808
      %v1292 = vunpack.c.0.s8 %v1291
      %v1293 = vlaneseq
      %v1294 = vshrl.u32 %v1293, 7
      %v1295 = vsub.s32 %v1292, %v1294
      %v1296 = vrot.slane %v1282, %v1295
      %v1297 = vcombine.high %v1289, %v1289
      %v1298 = vcombine.high %v1211, %v1211
      %v1300 = vunpack.c.l.s4 1983009808
      %v1301 = vunpack.c.0.s8 %v1300
      %v1302 = vlaneseq
      %v1303 = vshrl.u32 %v1302, 7
      %v1304 = vsub.s32 %v1301, %v1303
      %v1305 = vrot.slane %v1211, %v1304
      %v1307 = vunpack.c.l.s4 1983009808
      %v1308 = vunpack.c.0.s8 %v1307
      %v1309 = vlaneseq
      %v1310 = vshrl.u32 %v1309, 7
      %v1311 = vsub.s32 %v1308, %v1310
      %v1312 = vrot.slane %v1298, %v1311
      %v1313 = vcombine.high %v1305, %v1305
      %v1314 = vcombine.high %v1312, %v1312
      %v1315 = vcombine.high %v1212, %v1212
      %v1317 = vunpack.c.l.s4 1983009808
      %v1318 = vunpack.c.0.s8 %v1317
      %v1319 = vlaneseq
      %v1320 = vshrl.u32 %v1319, 7
      %v1321 = vsub.s32 %v1318, %v1320
      %v1322 = vrot.slane %v1212, %v1321
      %v1324 = vunpack.c.l.s4 1983009808
      %v1325 = vunpack.c.0.s8 %v1324
      %v1326 = vlaneseq
      %v1327 = vshrl.u32 %v1326, 7
      %v1328 = vsub.s32 %v1325, %v1327
      %v1329 = vrot.slane %v1315, %v1328
      %v1330 = vcombine.high %v1322, %v1322
      %v1331 = vcombine.high %v1213, %v1213
      %v1333 = vunpack.c.l.s4 1983009808
      %v1334 = vunpack.c.0.s8 %v1333
      %v1335 = vlaneseq
      %v1336 = vshrl.u32 %v1335, 7
      %v1337 = vsub.s32 %v1334, %v1336
      %v1338 = vrot.slane %v1213, %v1337
      %v1340 = vunpack.c.l.s4 1983009808
      %v1341 = vunpack.c.0.s8 %v1340
      %v1342 = vlaneseq
      %v1343 = vshrl.u32 %v1342, 7
      %v1344 = vsub.s32 %v1341, %v1343
      %v1345 = vrot.slane %v1331, %v1344
      %v1346 = vcombine.high %v1338, %v1338
      %v1347 = vcombine.high %v1345, %v1345
      %v1348 = vcombine.high %v1214, %v1214
      %v1350 = vunpack.c.l.s4 1983009808
      %v1351 = vunpack.c.0.s8 %v1350
      %v1352 = vlaneseq
      %v1353 = vshrl.u32 %v1352, 7
      %v1354 = vsub.s32 %v1351, %v1353
      %v1355 = vrot.slane %v1214, %v1354
      %v1357 = vunpack.c.l.s4 1983009808
      %v1358 = vunpack.c.0.s8 %v1357
      %v1359 = vlaneseq
      %v1360 = vshrl.u32 %v1359, 7
      %v1361 = vsub.s32 %v1358, %v1360
      %v1362 = vrot.slane %v1348, %v1361
      %v1363 = vcombine.high %v1355, %v1355
      %v1364 = vcombine.high %v1215, %v1215
      %v1366 = vunpack.c.l.s4 1983009808
      %v1367 = vunpack.c.0.s8 %v1366
      %v1368 = vlaneseq
      %v1369 = vshrl.u32 %v1368, 7
      %v1370 = vsub.s32 %v1367, %v1369
      %v1371 = vrot.slane %v1215, %v1370
      %v1373 = vunpack.c.l.s4 1983009808
      %v1374 = vunpack.c.0.s8 %v1373
      %v1375 = vlaneseq
      %v1376 = vshrl.u32 %v1375, 7
      %v1377 = vsub.s32 %v1374, %v1376
      %v1378 = vrot.slane %v1364, %v1377
      %v1379 = vcombine.high %v1371, %v1371
      %v1380 = vcombine.high %v1378, %v1378
      %v1381 = vcombine.high %v1216, %v1216
      %v1383 = vunpack.c.l.s4 1983009808
      %v1384 = vunpack.c.0.s8 %v1383
      %v1385 = vlaneseq
      %v1386 = vshrl.u32 %v1385, 7
      %v1387 = vsub.s32 %v1384, %v1386
      %v1388 = vrot.slane %v1216, %v1387
      %v1390 = vunpack.c.l.s4 1983009808
      %v1391 = vunpack.c.0.s8 %v1390
      %v1392 = vlaneseq
      %v1393 = vshrl.u32 %v1392, 7
      %v1394 = vsub.s32 %v1391, %v1393
      %v1395 = vrot.slane %v1381, %v1394
      %v1396 = vcombine.high %v1388, %v1388
      %v1397 = vcombine.high %v1217, %v1217
      %v1399 = vunpack.c.l.s4 1983009808
      %v1400 = vunpack.c.0.s8 %v1399
      %v1401 = vlaneseq
      %v1402 = vshrl.u32 %v1401, 7
      %v1403 = vsub.s32 %v1400, %v1402
      %v1404 = vrot.slane %v1217, %v1403
      %v1406 = vunpack.c.l.s4 1983009808
      %v1407 = vunpack.c.0.s8 %v1406
      %v1408 = vlaneseq
      %v1409 = vshrl.u32 %v1408, 7
      %v1410 = vsub.s32 %v1407, %v1409
      %v1411 = vrot.slane %v1397, %v1410
      %v1412 = vcombine.high %v1404, %v1404
      %v1413 = vcombine.high %v1411, %v1411
      %v1414 = vcombine.high %v1218, %v1218
      %v1416 = vunpack.c.l.s4 1983009808
      %v1417 = vunpack.c.0.s8 %v1416
      %v1418 = vlaneseq
      %v1419 = vshrl.u32 %v1418, 7
      %v1420 = vsub.s32 %v1417, %v1419
      %v1421 = vrot.slane %v1218, %v1420
      %v1423 = vunpack.c.l.s4 1983009808
      %v1424 = vunpack.c.0.s8 %v1423
      %v1425 = vlaneseq
      %v1426 = vshrl.u32 %v1425, 7
      %v1427 = vsub.s32 %v1424, %v1426
      %v1428 = vrot.slane %v1414, %v1427
      %v1429 = vcombine.high %v1421, %v1421
      %v1430 = vcombine.high %v1219, %v1219
      %v1432 = vunpack.c.l.s4 1983009808
      %v1433 = vunpack.c.0.s8 %v1432
      %v1434 = vlaneseq
      %v1435 = vshrl.u32 %v1434, 7
      %v1436 = vsub.s32 %v1433, %v1435
      %v1437 = vrot.slane %v1219, %v1436
      %v1439 = vunpack.c.l.s4 1983009808
      %v1440 = vunpack.c.0.s8 %v1439
      %v1441 = vlaneseq
      %v1442 = vshrl.u32 %v1441, 7
      %v1443 = vsub.s32 %v1440, %v1442
      %v1444 = vrot.slane %v1430, %v1443
      %v1445 = vcombine.high %v1437, %v1437
      %v1446 = vcombine.high %v1444, %v1444
      %v1447 = vcombine.high %v1220, %v1220
      %v1449 = vunpack.c.l.s4 1983009808
      %v1450 = vunpack.c.0.s8 %v1449
      %v1451 = vlaneseq
      %v1452 = vshrl.u32 %v1451, 7
      %v1453 = vsub.s32 %v1450, %v1452
      %v1454 = vrot.slane %v1220, %v1453
      %v1456 = vunpack.c.l.s4 1983009808
      %v1457 = vunpack.c.0.s8 %v1456
      %v1458 = vlaneseq
      %v1459 = vshrl.u32 %v1458, 7
      %v1460 = vsub.s32 %v1457, %v1459
      %v1461 = vrot.slane %v1447, %v1460
      %v1462 = vcombine.high %v1454, %v1454
      %v1463 = vcombine.high %v1221, %v1221
      %v1465 = vunpack.c.l.s4 1983009808
      %v1466 = vunpack.c.0.s8 %v1465
      %v1467 = vlaneseq
      %v1468 = vshrl.u32 %v1467, 7
      %v1469 = vsub.s32 %v1466, %v1468
      %v1470 = vrot.slane %v1221, %v1469
      %v1472 = vunpack.c.l.s4 1983009808
      %v1473 = vunpack.c.0.s8 %v1472
      %v1474 = vlaneseq
      %v1475 = vshrl.u32 %v1474, 7
      %v1476 = vsub.s32 %v1473, %v1475
      %v1477 = vrot.slane %v1463, %v1476
      %v1478 = vcombine.high %v1470, %v1470
      %v1479 = vcombine.high %v1477, %v1477
      %v1480 = vcombine.high %v1222, %v1222
      %v1482 = vunpack.c.l.s4 1983009808
      %v1483 = vunpack.c.0.s8 %v1482
      %v1484 = vlaneseq
      %v1485 = vshrl.u32 %v1484, 7
      %v1486 = vsub.s32 %v1483, %v1485
      %v1487 = vrot.slane %v1222, %v1486
      %v1489 = vunpack.c.l.s4 1983009808
      %v1490 = vunpack.c.0.s8 %v1489
      %v1491 = vlaneseq
      %v1492 = vshrl.u32 %v1491, 7
      %v1493 = vsub.s32 %v1490, %v1492
      %v1494 = vrot.slane %v1480, %v1493
      %v1495 = vcombine.high %v1487, %v1487
      %v1496 = vcombine.high %v1223, %v1223
      %v1498 = vunpack.c.l.s4 1983009808
      %v1499 = vunpack.c.0.s8 %v1498
      %v1500 = vlaneseq
      %v1501 = vshrl.u32 %v1500, 7
      %v1502 = vsub.s32 %v1499, %v1501
      %v1503 = vrot.slane %v1223, %v1502
      %v1505 = vunpack.c.l.s4 1983009808
      %v1506 = vunpack.c.0.s8 %v1505
      %v1507 = vlaneseq
      %v1508 = vshrl.u32 %v1507, 7
      %v1509 = vsub.s32 %v1506, %v1508
      %v1510 = vrot.slane %v1496, %v1509
      %v1511 = vcombine.high %v1503, %v1503
      %v1512 = vcombine.high %v1510, %v1510
      %v1513 = vcombine.high %v1224, %v1224
      %v1515 = vunpack.c.l.s4 1983009808
      %v1516 = vunpack.c.0.s8 %v1515
      %v1517 = vlaneseq
      %v1518 = vshrl.u32 %v1517, 7
      %v1519 = vsub.s32 %v1516, %v1518
      %v1520 = vrot.slane %v1224, %v1519
      %v1522 = vunpack.c.l.s4 1983009808
      %v1523 = vunpack.c.0.s8 %v1522
      %v1524 = vlaneseq
      %v1525 = vshrl.u32 %v1524, 7
      %v1526 = vsub.s32 %v1523, %v1525
      %v1527 = vrot.slane %v1513, %v1526
      %v1528 = vcombine.high %v1520, %v1520
      %v1529 = vcombine.high %v1225, %v1225
      %v1531 = vunpack.c.l.s4 1983009808
      %v1532 = vunpack.c.0.s8 %v1531
      %v1533 = vlaneseq
      %v1534 = vshrl.u32 %v1533, 7
      %v1535 = vsub.s32 %v1532, %v1534
      %v1536 = vrot.slane %v1225, %v1535
      %v1538 = vunpack.c.l.s4 1983009808
      %v1539 = vunpack.c.0.s8 %v1538
      %v1540 = vlaneseq
      %v1541 = vshrl.u32 %v1540, 7
      %v1542 = vsub.s32 %v1539, %v1541
      %v1543 = vrot.slane %v1529, %v1542
      %v1544 = vcombine.high %v1536, %v1536
      %v1545 = vcombine.high %v1543, %v1543
      %v1546 = vcombine.high %v1226, %v1226
      %v1548 = vunpack.c.l.s4 1983009808
      %v1549 = vunpack.c.0.s8 %v1548
      %v1550 = vlaneseq
      %v1551 = vshrl.u32 %v1550, 7
      %v1552 = vsub.s32 %v1549, %v1551
      %v1553 = vrot.slane %v1226, %v1552
      %v1555 = vunpack.c.l.s4 1983009808
      %v1556 = vunpack.c.0.s8 %v1555
      %v1557 = vlaneseq
      %v1558 = vshrl.u32 %v1557, 7
      %v1559 = vsub.s32 %v1556, %v1558
      %v1560 = vrot.slane %v1546, %v1559
      %v1561 = vcombine.high %v1553, %v1553
      %v1562 = vcombine.high %v1227, %v1227
      %v1564 = vunpack.c.l.s4 1983009808
      %v1565 = vunpack.c.0.s8 %v1564
      %v1566 = vlaneseq
      %v1567 = vshrl.u32 %v1566, 7
      %v1568 = vsub.s32 %v1565, %v1567
      %v1569 = vrot.slane %v1227, %v1568
      %v1571 = vunpack.c.l.s4 1983009808
      %v1572 = vunpack.c.0.s8 %v1571
      %v1573 = vlaneseq
      %v1574 = vshrl.u32 %v1573, 7
      %v1575 = vsub.s32 %v1572, %v1574
      %v1576 = vrot.slane %v1562, %v1575
      %v1577 = vcombine.high %v1569, %v1569
      %v1578 = vcombine.high %v1576, %v1576
      %v1579 = vcombine.high %v1228, %v1228
      %v1581 = vunpack.c.l.s4 1983009808
      %v1582 = vunpack.c.0.s8 %v1581
      %v1583 = vlaneseq
      %v1584 = vshrl.u32 %v1583, 7
      %v1585 = vsub.s32 %v1582, %v1584
      %v1586 = vrot.slane %v1228, %v1585
      %v1588 = vunpack.c.l.s4 1983009808
      %v1589 = vunpack.c.0.s8 %v1588
      %v1590 = vlaneseq
      %v1591 = vshrl.u32 %v1590, 7
      %v1592 = vsub.s32 %v1589, %v1591
      %v1593 = vrot.slane %v1579, %v1592
      %v1594 = vcombine.high %v1586, %v1586
      %v1595 = vcombine.high %v1229, %v1229
      %v1597 = vunpack.c.l.s4 1983009808
      %v1598 = vunpack.c.0.s8 %v1597
      %v1599 = vlaneseq
      %v1600 = vshrl.u32 %v1599, 7
      %v1601 = vsub.s32 %v1598, %v1600
      %v1602 = vrot.slane %v1229, %v1601
      %v1604 = vunpack.c.l.s4 1983009808
      %v1605 = vunpack.c.0.s8 %v1604
      %v1606 = vlaneseq
      %v1607 = vshrl.u32 %v1606, 7
      %v1608 = vsub.s32 %v1605, %v1607
      %v1609 = vrot.slane %v1595, %v1608
      %v1610 = vcombine.high %v1602, %v1602
      %v1611 = vcombine.high %v1609, %v1609
      %v1612 = vcombine.high %v1230, %v1230
      %v1614 = vunpack.c.l.s4 1983009808
      %v1615 = vunpack.c.0.s8 %v1614
      %v1616 = vlaneseq
      %v1617 = vshrl.u32 %v1616, 7
      %v1618 = vsub.s32 %v1615, %v1617
      %v1619 = vrot.slane %v1230, %v1618
      %v1621 = vunpack.c.l.s4 1983009808
      %v1622 = vunpack.c.0.s8 %v1621
      %v1623 = vlaneseq
      %v1624 = vshrl.u32 %v1623, 7
      %v1625 = vsub.s32 %v1622, %v1624
      %v1626 = vrot.slane %v1612, %v1625
      %v1627 = vcombine.high %v1619, %v1619
      %v1628 = vcombine.high %v1231, %v1231
      %v1630 = vunpack.c.l.s4 1983009808
      %v1631 = vunpack.c.0.s8 %v1630
      %v1632 = vlaneseq
      %v1633 = vshrl.u32 %v1632, 7
      %v1634 = vsub.s32 %v1631, %v1633
      %v1635 = vrot.slane %v1231, %v1634
      %v1637 = vunpack.c.l.s4 1983009808
      %v1638 = vunpack.c.0.s8 %v1637
      %v1639 = vlaneseq
      %v1640 = vshrl.u32 %v1639, 7
      %v1641 = vsub.s32 %v1638, %v1640
      %v1642 = vrot.slane %v1628, %v1641
      %v1643 = vcombine.high %v1635, %v1635
      %v1644 = vcombine.high %v1642, %v1642
      %v1645 = vcombine.high %v1232, %v1232
      %v1647 = vunpack.c.l.s4 1983009808
      %v1648 = vunpack.c.0.s8 %v1647
      %v1649 = vlaneseq
      %v1650 = vshrl.u32 %v1649, 7
      %v1651 = vsub.s32 %v1648, %v1650
      %v1652 = vrot.slane %v1232, %v1651
      %v1654 = vunpack.c.l.s4 1983009808
      %v1655 = vunpack.c.0.s8 %v1654
      %v1656 = vlaneseq
      %v1657 = vshrl.u32 %v1656, 7
      %v1658 = vsub.s32 %v1655, %v1657
      %v1659 = vrot.slane %v1645, %v1658
      %v1660 = vcombine.high %v1652, %v1652
      %v1661 = vcombine.high %v1233, %v1233
      %v1663 = vunpack.c.l.s4 1983009808
      %v1664 = vunpack.c.0.s8 %v1663
      %v1665 = vlaneseq
      %v1666 = vshrl.u32 %v1665, 7
      %v1667 = vsub.s32 %v1664, %v1666
      %v1668 = vrot.slane %v1233, %v1667
      %v1670 = vunpack.c.l.s4 1983009808
      %v1671 = vunpack.c.0.s8 %v1670
      %v1672 = vlaneseq
      %v1673 = vshrl.u32 %v1672, 7
      %v1674 = vsub.s32 %v1671, %v1673
      %v1675 = vrot.slane %v1661, %v1674
      %v1676 = vcombine.high %v1668, %v1668
      %v1677 = vcombine.high %v1675, %v1675
      %v1678 = vcombine.high %v1234, %v1234
      %v1680 = vunpack.c.l.s4 1983009808
      %v1681 = vunpack.c.0.s8 %v1680
      %v1682 = vlaneseq
      %v1683 = vshrl.u32 %v1682, 7
      %v1684 = vsub.s32 %v1681, %v1683
      %v1685 = vrot.slane %v1234, %v1684
      %v1687 = vunpack.c.l.s4 1983009808
      %v1688 = vunpack.c.0.s8 %v1687
      %v1689 = vlaneseq
      %v1690 = vshrl.u32 %v1689, 7
      %v1691 = vsub.s32 %v1688, %v1690
      %v1692 = vrot.slane %v1678, %v1691
      %v1693 = vcombine.high %v1685, %v1685
      %v1694 = vcombine.high %v1235, %v1235
      %v1696 = vunpack.c.l.s4 1983009808
      %v1697 = vunpack.c.0.s8 %v1696
      %v1698 = vlaneseq
      %v1699 = vshrl.u32 %v1698, 7
      %v1700 = vsub.s32 %v1697, %v1699
      %v1701 = vrot.slane %v1235, %v1700
      %v1703 = vunpack.c.l.s4 1983009808
      %v1704 = vunpack.c.0.s8 %v1703
      %v1705 = vlaneseq
      %v1706 = vshrl.u32 %v1705, 7
      %v1707 = vsub.s32 %v1704, %v1706
      %v1708 = vrot.slane %v1694, %v1707
      %v1709 = vcombine.high %v1701, %v1701
      %v1710 = vcombine.high %v1708, %v1708
      %v1711 = vcombine.high %v1236, %v1236
      %v1713 = vunpack.c.l.s4 1983009808
      %v1714 = vunpack.c.0.s8 %v1713
      %v1715 = vlaneseq
      %v1716 = vshrl.u32 %v1715, 7
      %v1717 = vsub.s32 %v1714, %v1716
      %v1718 = vrot.slane %v1236, %v1717
      %v1720 = vunpack.c.l.s4 1983009808
      %v1721 = vunpack.c.0.s8 %v1720
      %v1722 = vlaneseq
      %v1723 = vshrl.u32 %v1722, 7
      %v1724 = vsub.s32 %v1721, %v1723
      %v1725 = vrot.slane %v1711, %v1724
      %v1726 = vcombine.high %v1718, %v1718
      %v1727 = vld [vmem:[%s1] sm:$0xff]
      %v1728 = vld [vmem:[%s1 + $0x8] sm:$0xff]
      %v1729 = vld [vmem:[%s1 + $0x10] sm:$0xff]
      %v1730 = vld [vmem:[%s1 + $0x18] sm:$0xff]
      %v1731 = vld [vmem:[%s1 + $0x20] sm:$0xf]
      %v1732 = vld [vmem:[%s2] sm:$0x1]
      %v1734 = vlaneseq
      %v1735 = vshrl.u32 %v1734, 7
      %v1736 = vsub.s32 0, %v1735
      %v1737 = vrot.slane %v1732, %v1736
      %v1739 = vcombine.low %v1272, %v1280
      %v1740 = vcombine.low %v1279, %v1281
      %v1742 = vunpack.c.l.s4 1983009808
      %v1743 = vunpack.c.0.s8 %v1742
      %v1744 = vlaneseq
      %v1745 = vshrl.u32 %v1744, 7
      %v1746 = vsub.s32 %v1743, %v1745
      %v1747 = vrot.slane %v1739, %v1746
      %v1749 = vunpack.c.l.s4 1983009808
      %v1750 = vunpack.c.0.s8 %v1749
      %v1751 = vlaneseq
      %v1752 = vshrl.u32 %v1751, 7
      %v1753 = vsub.s32 %v1750, %v1752
      %v1754 = vrot.slane %v1740, %v1753
      %v1755 = vcombine.low %v1747, %v1754
      %v1756 = vcombine.low %v1289, %v1297
      %v1757 = vcombine.low %v1296, %v1305
      %v1759 = vunpack.c.l.s4 1983009808
      %v1760 = vunpack.c.0.s8 %v1759
      %v1761 = vlaneseq
      %v1762 = vshrl.u32 %v1761, 7
      %v1763 = vsub.s32 %v1760, %v1762
      %v1764 = vrot.slane %v1756, %v1763
      %v1766 = vunpack.c.l.s4 1983009808
      %v1767 = vunpack.c.0.s8 %v1766
      %v1768 = vlaneseq
      %v1769 = vshrl.u32 %v1768, 7
      %v1770 = vsub.s32 %v1767, %v1769
      %v1771 = vrot.slane %v1757, %v1770
      %v1772 = vcombine.low %v1764, %v1771
      %v1773 = vcombine.low %v1313, %v1312
      %v1774 = vcombine.low %v1314, %v1322
      %v1776 = vunpack.c.l.s4 1983009808
      %v1777 = vunpack.c.0.s8 %v1776
      %v1778 = vlaneseq
      %v1779 = vshrl.u32 %v1778, 7
      %v1780 = vsub.s32 %v1777, %v1779
      %v1781 = vrot.slane %v1773, %v1780
      %v1783 = vunpack.c.l.s4 1983009808
      %v1784 = vunpack.c.0.s8 %v1783
      %v1785 = vlaneseq
      %v1786 = vshrl.u32 %v1785, 7
      %v1787 = vsub.s32 %v1784, %v1786
      %v1788 = vrot.slane %v1774, %v1787
      %v1789 = vcombine.low %v1781, %v1788
      %v1790 = vcombine.low %v1330, %v1329
      %v1791 = vcombine.low %v1338, %v1346
      %v1793 = vunpack.c.l.s4 1983009808
      %v1794 = vunpack.c.0.s8 %v1793
      %v1795 = vlaneseq
      %v1796 = vshrl.u32 %v1795, 7
      %v1797 = vsub.s32 %v1794, %v1796
      %v1798 = vrot.slane %v1790, %v1797
      %v1800 = vunpack.c.l.s4 1983009808
      %v1801 = vunpack.c.0.s8 %v1800
      %v1802 = vlaneseq
      %v1803 = vshrl.u32 %v1802, 7
      %v1804 = vsub.s32 %v1801, %v1803
      %v1805 = vrot.slane %v1791, %v1804
      %v1806 = vcombine.low %v1798, %v1805
      %v1807 = vcombine.low %v1345, %v1347
      %v1808 = vcombine.low %v1355, %v1363
      %v1810 = vunpack.c.l.s4 1983009808
      %v1811 = vunpack.c.0.s8 %v1810
      %v1812 = vlaneseq
      %v1813 = vshrl.u32 %v1812, 7
      %v1814 = vsub.s32 %v1811, %v1813
      %v1815 = vrot.slane %v1807, %v1814
      %v1817 = vunpack.c.l.s4 1983009808
      %v1818 = vunpack.c.0.s8 %v1817
      %v1819 = vlaneseq
      %v1820 = vshrl.u32 %v1819, 7
      %v1821 = vsub.s32 %v1818, %v1820
      %v1822 = vrot.slane %v1808, %v1821
      %v1823 = vcombine.low %v1815, %v1822
      %v1824 = vcombine.low %v1362, %v1371
      %v1825 = vcombine.low %v1379, %v1378
      %v1827 = vunpack.c.l.s4 1983009808
      %v1828 = vunpack.c.0.s8 %v1827
      %v1829 = vlaneseq
      %v1830 = vshrl.u32 %v1829, 7
      %v1831 = vsub.s32 %v1828, %v1830
      %v1832 = vrot.slane %v1824, %v1831
      %v1834 = vunpack.c.l.s4 1983009808
      %v1835 = vunpack.c.0.s8 %v1834
      %v1836 = vlaneseq
      %v1837 = vshrl.u32 %v1836, 7
      %v1838 = vsub.s32 %v1835, %v1837
      %v1839 = vrot.slane %v1825, %v1838
      %v1840 = vcombine.low %v1832, %v1839
      %v1841 = vcombine.low %v1380, %v1388
      %v1842 = vcombine.low %v1396, %v1395
      %v1844 = vunpack.c.l.s4 1983009808
      %v1845 = vunpack.c.0.s8 %v1844
      %v1846 = vlaneseq
      %v1847 = vshrl.u32 %v1846, 7
      %v1848 = vsub.s32 %v1845, %v1847
      %v1849 = vrot.slane %v1841, %v1848
      %v1851 = vunpack.c.l.s4 1983009808
      %v1852 = vunpack.c.0.s8 %v1851
      %v1853 = vlaneseq
      %v1854 = vshrl.u32 %v1853, 7
      %v1855 = vsub.s32 %v1852, %v1854
      %v1856 = vrot.slane %v1842, %v1855
      %v1857 = vcombine.low %v1849, %v1856
      %v1858 = vcombine.low %v1404, %v1412
      %v1859 = vcombine.low %v1411, %v1413
      %v1861 = vunpack.c.l.s4 1983009808
      %v1862 = vunpack.c.0.s8 %v1861
      %v1863 = vlaneseq
      %v1864 = vshrl.u32 %v1863, 7
      %v1865 = vsub.s32 %v1862, %v1864
      %v1866 = vrot.slane %v1858, %v1865
      %v1868 = vunpack.c.l.s4 1983009808
      %v1869 = vunpack.c.0.s8 %v1868
      %v1870 = vlaneseq
      %v1871 = vshrl.u32 %v1870, 7
      %v1872 = vsub.s32 %v1869, %v1871
      %v1873 = vrot.slane %v1859, %v1872
      %v1874 = vcombine.low %v1866, %v1873
      %v1875 = vcombine.low %v1421, %v1429
      %v1876 = vcombine.low %v1428, %v1437
      %v1878 = vunpack.c.l.s4 1983009808
      %v1879 = vunpack.c.0.s8 %v1878
      %v1880 = vlaneseq
      %v1881 = vshrl.u32 %v1880, 7
      %v1882 = vsub.s32 %v1879, %v1881
      %v1883 = vrot.slane %v1875, %v1882
      %v1885 = vunpack.c.l.s4 1983009808
      %v1886 = vunpack.c.0.s8 %v1885
      %v1887 = vlaneseq
      %v1888 = vshrl.u32 %v1887, 7
      %v1889 = vsub.s32 %v1886, %v1888
      %v1890 = vrot.slane %v1876, %v1889
      %v1891 = vcombine.low %v1883, %v1890
      %v1892 = vcombine.low %v1445, %v1444
      %v1893 = vcombine.low %v1446, %v1454
      %v1895 = vunpack.c.l.s4 1983009808
      %v1896 = vunpack.c.0.s8 %v1895
      %v1897 = vlaneseq
      %v1898 = vshrl.u32 %v1897, 7
      %v1899 = vsub.s32 %v1896, %v1898
      %v1900 = vrot.slane %v1892, %v1899
      %v1902 = vunpack.c.l.s4 1983009808
      %v1903 = vunpack.c.0.s8 %v1902
      %v1904 = vlaneseq
      %v1905 = vshrl.u32 %v1904, 7
      %v1906 = vsub.s32 %v1903, %v1905
      %v1907 = vrot.slane %v1893, %v1906
      %v1908 = vcombine.low %v1900, %v1907
      %v1909 = vcombine.low %v1462, %v1461
      %v1910 = vcombine.low %v1470, %v1478
      %v1912 = vunpack.c.l.s4 1983009808
      %v1913 = vunpack.c.0.s8 %v1912
      %v1914 = vlaneseq
      %v1915 = vshrl.u32 %v1914, 7
      %v1916 = vsub.s32 %v1913, %v1915
      %v1917 = vrot.slane %v1909, %v1916
      %v1919 = vunpack.c.l.s4 1983009808
      %v1920 = vunpack.c.0.s8 %v1919
      %v1921 = vlaneseq
      %v1922 = vshrl.u32 %v1921, 7
      %v1923 = vsub.s32 %v1920, %v1922
      %v1924 = vrot.slane %v1910, %v1923
      %v1925 = vcombine.low %v1917, %v1924
      %v1926 = vcombine.low %v1477, %v1479
      %v1927 = vcombine.low %v1487, %v1495
      %v1929 = vunpack.c.l.s4 1983009808
      %v1930 = vunpack.c.0.s8 %v1929
      %v1931 = vlaneseq
      %v1932 = vshrl.u32 %v1931, 7
      %v1933 = vsub.s32 %v1930, %v1932
      %v1934 = vrot.slane %v1926, %v1933
      %v1936 = vunpack.c.l.s4 1983009808
      %v1937 = vunpack.c.0.s8 %v1936
      %v1938 = vlaneseq
      %v1939 = vshrl.u32 %v1938, 7
      %v1940 = vsub.s32 %v1937, %v1939
      %v1941 = vrot.slane %v1927, %v1940
      %v1942 = vcombine.low %v1934, %v1941
      %v1943 = vcombine.low %v1494, %v1503
      %v1944 = vcombine.low %v1511, %v1510
      %v1946 = vunpack.c.l.s4 1983009808
      %v1947 = vunpack.c.0.s8 %v1946
      %v1948 = vlaneseq
      %v1949 = vshrl.u32 %v1948, 7
      %v1950 = vsub.s32 %v1947, %v1949
      %v1951 = vrot.slane %v1943, %v1950
      %v1953 = vunpack.c.l.s4 1983009808
      %v1954 = vunpack.c.0.s8 %v1953
      %v1955 = vlaneseq
      %v1956 = vshrl.u32 %v1955, 7
      %v1957 = vsub.s32 %v1954, %v1956
      %v1958 = vrot.slane %v1944, %v1957
      %v1959 = vcombine.low %v1951, %v1958
      %v1960 = vcombine.low %v1512, %v1520
      %v1961 = vcombine.low %v1528, %v1527
      %v1963 = vunpack.c.l.s4 1983009808
      %v1964 = vunpack.c.0.s8 %v1963
      %v1965 = vlaneseq
      %v1966 = vshrl.u32 %v1965, 7
      %v1967 = vsub.s32 %v1964, %v1966
      %v1968 = vrot.slane %v1960, %v1967
      %v1970 = vunpack.c.l.s4 1983009808
      %v1971 = vunpack.c.0.s8 %v1970
      %v1972 = vlaneseq
      %v1973 = vshrl.u32 %v1972, 7
      %v1974 = vsub.s32 %v1971, %v1973
      %v1975 = vrot.slane %v1961, %v1974
      %v1976 = vcombine.low %v1968, %v1975
      %v1977 = vcombine.low %v1536, %v1544
      %v1978 = vcombine.low %v1543, %v1545
      %v1980 = vunpack.c.l.s4 1983009808
      %v1981 = vunpack.c.0.s8 %v1980
      %v1982 = vlaneseq
      %v1983 = vshrl.u32 %v1982, 7
      %v1984 = vsub.s32 %v1981, %v1983
      %v1985 = vrot.slane %v1977, %v1984
      %v1987 = vunpack.c.l.s4 1983009808
      %v1988 = vunpack.c.0.s8 %v1987
      %v1989 = vlaneseq
      %v1990 = vshrl.u32 %v1989, 7
      %v1991 = vsub.s32 %v1988, %v1990
      %v1992 = vrot.slane %v1978, %v1991
      %v1993 = vcombine.low %v1985, %v1992
      %v1994 = vcombine.low %v1553, %v1561
      %v1995 = vcombine.low %v1560, %v1569
      %v1997 = vunpack.c.l.s4 1983009808
      %v1998 = vunpack.c.0.s8 %v1997
      %v1999 = vlaneseq
      %v2000 = vshrl.u32 %v1999, 7
      %v2001 = vsub.s32 %v1998, %v2000
      %v2002 = vrot.slane %v1994, %v2001
      %v2004 = vunpack.c.l.s4 1983009808
      %v2005 = vunpack.c.0.s8 %v2004
      %v2006 = vlaneseq
      %v2007 = vshrl.u32 %v2006, 7
      %v2008 = vsub.s32 %v2005, %v2007
      %v2009 = vrot.slane %v1995, %v2008
      %v2010 = vcombine.low %v2002, %v2009
      %v2011 = vcombine.low %v1577, %v1576
      %v2012 = vcombine.low %v1578, %v1586
      %v2014 = vunpack.c.l.s4 1983009808
      %v2015 = vunpack.c.0.s8 %v2014
      %v2016 = vlaneseq
      %v2017 = vshrl.u32 %v2016, 7
      %v2018 = vsub.s32 %v2015, %v2017
      %v2019 = vrot.slane %v2011, %v2018
      %v2021 = vunpack.c.l.s4 1983009808
      %v2022 = vunpack.c.0.s8 %v2021
      %v2023 = vlaneseq
      %v2024 = vshrl.u32 %v2023, 7
      %v2025 = vsub.s32 %v2022, %v2024
      %v2026 = vrot.slane %v2012, %v2025
      %v2027 = vcombine.low %v2019, %v2026
      %v2028 = vcombine.low %v1594, %v1593
      %v2029 = vcombine.low %v1602, %v1610
      %v2031 = vunpack.c.l.s4 1983009808
      %v2032 = vunpack.c.0.s8 %v2031
      %v2033 = vlaneseq
      %v2034 = vshrl.u32 %v2033, 7
      %v2035 = vsub.s32 %v2032, %v2034
      %v2036 = vrot.slane %v2028, %v2035
      %v2038 = vunpack.c.l.s4 1983009808
      %v2039 = vunpack.c.0.s8 %v2038
      %v2040 = vlaneseq
      %v2041 = vshrl.u32 %v2040, 7
      %v2042 = vsub.s32 %v2039, %v2041
      %v2043 = vrot.slane %v2029, %v2042
      %v2044 = vcombine.low %v2036, %v2043
      %v2045 = vcombine.low %v1609, %v1611
      %v2046 = vcombine.low %v1619, %v1627
      %v2048 = vunpack.c.l.s4 1983009808
      %v2049 = vunpack.c.0.s8 %v2048
      %v2050 = vlaneseq
      %v2051 = vshrl.u32 %v2050, 7
      %v2052 = vsub.s32 %v2049, %v2051
      %v2053 = vrot.slane %v2045, %v2052
      %v2055 = vunpack.c.l.s4 1983009808
      %v2056 = vunpack.c.0.s8 %v2055
      %v2057 = vlaneseq
      %v2058 = vshrl.u32 %v2057, 7
      %v2059 = vsub.s32 %v2056, %v2058
      %v2060 = vrot.slane %v2046, %v2059
      %v2061 = vcombine.low %v2053, %v2060
      %v2062 = vcombine.low %v1626, %v1635
      %v2063 = vcombine.low %v1643, %v1642
      %v2065 = vunpack.c.l.s4 1983009808
      %v2066 = vunpack.c.0.s8 %v2065
      %v2067 = vlaneseq
      %v2068 = vshrl.u32 %v2067, 7
      %v2069 = vsub.s32 %v2066, %v2068
      %v2070 = vrot.slane %v2062, %v2069
      %v2072 = vunpack.c.l.s4 1983009808
      %v2073 = vunpack.c.0.s8 %v2072
      %v2074 = vlaneseq
      %v2075 = vshrl.u32 %v2074, 7
      %v2076 = vsub.s32 %v2073, %v2075
      %v2077 = vrot.slane %v2063, %v2076
      %v2078 = vcombine.low %v2070, %v2077
      %v2079 = vcombine.low %v1644, %v1652
      %v2080 = vcombine.low %v1660, %v1659
      %v2082 = vunpack.c.l.s4 1983009808
      %v2083 = vunpack.c.0.s8 %v2082
      %v2084 = vlaneseq
      %v2085 = vshrl.u32 %v2084, 7
      %v2086 = vsub.s32 %v2083, %v2085
      %v2087 = vrot.slane %v2079, %v2086
      %v2089 = vunpack.c.l.s4 1983009808
      %v2090 = vunpack.c.0.s8 %v2089
      %v2091 = vlaneseq
      %v2092 = vshrl.u32 %v2091, 7
      %v2093 = vsub.s32 %v2090, %v2092
      %v2094 = vrot.slane %v2080, %v2093
      %v2095 = vcombine.low %v2087, %v2094
      %v2096 = vcombine.low %v1668, %v1676
      %v2097 = vcombine.low %v1675, %v1677
      %v2099 = vunpack.c.l.s4 1983009808
      %v2100 = vunpack.c.0.s8 %v2099
      %v2101 = vlaneseq
      %v2102 = vshrl.u32 %v2101, 7
      %v2103 = vsub.s32 %v2100, %v2102
      %v2104 = vrot.slane %v2096, %v2103
      %v2106 = vunpack.c.l.s4 1983009808
      %v2107 = vunpack.c.0.s8 %v2106
      %v2108 = vlaneseq
      %v2109 = vshrl.u32 %v2108, 7
      %v2110 = vsub.s32 %v2107, %v2109
      %v2111 = vrot.slane %v2097, %v2110
      %v2112 = vcombine.low %v2104, %v2111
      %v2113 = vcombine.low %v1685, %v1693
      %v2114 = vcombine.low %v1692, %v1701
      %v2116 = vunpack.c.l.s4 1983009808
      %v2117 = vunpack.c.0.s8 %v2116
      %v2118 = vlaneseq
      %v2119 = vshrl.u32 %v2118, 7
      %v2120 = vsub.s32 %v2117, %v2119
      %v2121 = vrot.slane %v2113, %v2120
      %v2123 = vunpack.c.l.s4 1983009808
      %v2124 = vunpack.c.0.s8 %v2123
      %v2125 = vlaneseq
      %v2126 = vshrl.u32 %v2125, 7
      %v2127 = vsub.s32 %v2124, %v2126
      %v2128 = vrot.slane %v2114, %v2127
      %v2129 = vcombine.low %v2121, %v2128
      %v2130 = vcombine.low %v1709, %v1708
      %v2131 = vcombine.low %v1710, %v1718
      %v2133 = vunpack.c.l.s4 1983009808
      %v2134 = vunpack.c.0.s8 %v2133
      %v2135 = vlaneseq
      %v2136 = vshrl.u32 %v2135, 7
      %v2137 = vsub.s32 %v2134, %v2136
      %v2138 = vrot.slane %v2130, %v2137
      %v2140 = vunpack.c.l.s4 1983009808
      %v2141 = vunpack.c.0.s8 %v2140
      %v2142 = vlaneseq
      %v2143 = vshrl.u32 %v2142, 7
      %v2144 = vsub.s32 %v2141, %v2143
      %v2145 = vrot.slane %v2131, %v2144
      %v2146 = vcombine.low %v2138, %v2145
      %v2147 = vcombine.low %v1726, %v1725
      %v2149 = vunpack.c.l.s4 1983009808
      %v2150 = vunpack.c.0.s8 %v2149
      %v2151 = vlaneseq
      %v2152 = vshrl.u32 %v2151, 7
      %v2153 = vsub.s32 %v2150, %v2152
      %v2154 = vrot.slane %v2147, %v2153
      %vm2155 = vcmask 293888
      %v2156 = vsel %vm2155, %v1755, 0
      %v2158 = vsel %vm2155, %v1772, 0
      %v2160 = vsel %vm2155, %v1789, 0
      %v2162 = vsel %vm2155, %v1806, 0
      %v2164 = vsel %vm2155, %v1823, 0
      %v2166 = vsel %vm2155, %v1840, 0
      %v2168 = vsel %vm2155, %v1857, 0
      %v2170 = vsel %vm2155, %v1874, 0
      %v2172 = vsel %vm2155, %v1891, 0
      %v2174 = vsel %vm2155, %v1908, 0
      %v2176 = vsel %vm2155, %v1925, 0
      %v2178 = vsel %vm2155, %v1942, 0
      %v2180 = vsel %vm2155, %v1959, 0
      %v2182 = vsel %vm2155, %v1976, 0
      %v2184 = vsel %vm2155, %v1993, 0
      %v2186 = vsel %vm2155, %v2010, 0
      %v2188 = vsel %vm2155, %v2027, 0
      %v2190 = vsel %vm2155, %v2044, 0
      %v2192 = vsel %vm2155, %v2061, 0
      %v2194 = vsel %vm2155, %v2078, 0
      %v2196 = vsel %vm2155, %v2095, 0
      %v2198 = vsel %vm2155, %v2112, 0
      %v2200 = vsel %vm2155, %v2129, 0
      %v2202 = vsel %vm2155, %v2146, 0
      %v2204 = vsel %vm2155, %v2154, 0
      %vm2206 = vcmask 1043456
      %v2208 = vsel %vm2206, %v1731, 0
      %2210 = vmatprep.subr.mxu0 0.0
      %2211 = vmatpush1.msra.mxu0 0.0
      %2212 = vmatprep.subr.mxu0 0.0
      %2213 = vmatpush1.msra.mxu0 0.0
      %2214 = vmatprep.subr.mxu0 0.0
      %2215 = vmatpush1.msra.mxu0 0.0
      %2216 = vmatprep.subr.mxu0 0.0
      %2217 = vmatpush1.msra.mxu0 0.0
      %2218 = vmatprep.subr.mxu0 0.0
      %2219 = vmatpush1.msra.mxu0 0.0
      %2220 = vmatprep.subr.mxu0 0.0
      %2221 = vmatpush1.msra.mxu0 0.0
      %2222 = vmatprep.subr.mxu0 0.0
      %2223 = vmatpush1.msra.mxu0 0.0
      %2224 = vmatprep.subr.mxu0 0.0
      %2225 = vmatpush1.msra.mxu0 0.0
      %2226 = vmatprep.subr.mxu0 0.0
      %2227 = vmatpush1.msra.mxu0 0.0
      %2228 = vmatprep.subr.mxu0 0.0
      %2229 = vmatpush1.msra.mxu0 0.0
      %2230 = vmatprep.subr.mxu0 0.0
      %2231 = vmatpush1.msra.mxu0 0.0
      %2232 = vmatprep.subr.mxu0 0.0
      %2233 = vmatpush1.msra.mxu0 %v2208
      %2234 = vmatprep.subr.mxu0 0.0
      %2235 = vmatpush1.msra.mxu0 %v1730
      %2236 = vmatprep.subr.mxu0 0.0
      %2237 = vmatpush1.msra.mxu0 %v1729
      %2238 = vmatprep.subr.mxu0 0.0
      %2239 = vmatpush1.msra.mxu0 %v1728
      %2240 = vmatprep.subr.mxu0 0.0
      %2241 = vmatpush1.msra.mxu0 %v1727
      %2242 = vmatprep.subr.mxu0 0.0
      %2243 = vmatpush2.msra.mxu0 0.0
      %2244 = vmatprep.subr.mxu0 0.0
      %2245 = vmatpush2.msra.mxu0 0.0
      %2246 = vmatprep.subr.mxu0 0.0
      %2247 = vmatpush2.msra.mxu0 0.0
      %2248 = vmatprep.subr.mxu0 0.0
      %2249 = vmatpush2.msra.mxu0 0.0
      %2250 = vmatprep.subr.mxu0 0.0
      %2251 = vmatpush2.msra.mxu0 0.0
      %2252 = vmatprep.subr.mxu0 0.0
      %2253 = vmatpush2.msra.mxu0 0.0
      %2254 = vmatprep.subr.mxu0 0.0
      %2255 = vmatpush2.msra.mxu0 0.0
      %2256 = vmatprep.subr.mxu0 0.0
      %2257 = vmatpush2.msra.mxu0 0.0
      %2258 = vmatprep.subr.mxu0 0.0
      %2259 = vmatpush2.msra.mxu0 0.0
      %2260 = vmatprep.subr.mxu0 0.0
      %2261 = vmatpush2.msra.mxu0 0.0
      %2262 = vmatprep.subr.mxu0 0.0
      %2263 = vmatpush2.msra.mxu0 0.0
      %2264 = vmatprep.subr.mxu0 0.0
      %2265 = vmatpush2.msra.mxu0 0.0
      %2266 = vmatprep.subr.mxu0 0.0
      %2267 = vmatpush2.msra.mxu0 0.0
      %2268 = vmatprep.subr.mxu0 0.0
      %2269 = vmatpush2.msra.mxu0 0.0
      %2270 = vmatprep.subr.mxu0 0.0
      %2271 = vmatpush2.msra.mxu0 0.0
      %2272 = vmatprep.subr.mxu0 0.0
      %2273 = vmatpush2.msra.mxu0 0.0
      %2274 = vmatprep.mubr.f32.mxu0 0.0
      %2275 = vmatmul.mubr.f32.gmra.mxu0 %v2156
      %v2276 = vpop.f32.mrf.mxu0
      %v2277 = vadd.f32 %v1737, %v2276
      %v2278 = vpop.f32.mrf.mxu0
      %2279 = vmatprep.mubr.f32.mxu0 0.0
      %2280 = vmatmul.mubr.f32.gmra.mxu0 %v2158
      %v2281 = vpop.f32.mrf.mxu0
      %v2282 = vadd.f32 %v1737, %v2281
      %v2283 = vpop.f32.mrf.mxu0
      %2284 = vmatprep.mubr.f32.mxu0 0.0
      %2285 = vmatmul.mubr.f32.gmra.mxu0 %v2160
      %v2286 = vpop.f32.mrf.mxu0
      %v2287 = vadd.f32 %v1737, %v2286
      %v2288 = vpop.f32.mrf.mxu0
      %2289 = vmatprep.mubr.f32.mxu0 0.0
      %2290 = vmatmul.mubr.f32.gmra.mxu0 %v2162
      %v2291 = vpop.f32.mrf.mxu0
      %v2292 = vadd.f32 %v1737, %v2291
      %v2293 = vpop.f32.mrf.mxu0
      %2294 = vmatprep.mubr.f32.mxu0 0.0
      %2295 = vmatmul.mubr.f32.gmra.mxu0 %v2164
      %v2296 = vpop.f32.mrf.mxu0
      %v2297 = vadd.f32 %v1737, %v2296
      %v2298 = vpop.f32.mrf.mxu0
      %2299 = vmatprep.mubr.f32.mxu0 0.0
      %2300 = vmatmul.mubr.f32.gmra.mxu0 %v2166
      %v2301 = vpop.f32.mrf.mxu0
      %v2302 = vadd.f32 %v1737, %v2301
      %v2303 = vpop.f32.mrf.mxu0
      %2304 = vmatprep.mubr.f32.mxu0 0.0
      %2305 = vmatmul.mubr.f32.gmra.mxu0 %v2168
      %v2306 = vpop.f32.mrf.mxu0
      %v2307 = vadd.f32 %v1737, %v2306
      %v2308 = vpop.f32.mrf.mxu0
      %2309 = vmatprep.mubr.f32.mxu0 0.0
      %2310 = vmatmul.mubr.f32.gmra.mxu0 %v2170
      %v2311 = vpop.f32.mrf.mxu0
      %v2312 = vadd.f32 %v1737, %v2311
      %v2313 = vpop.f32.mrf.mxu0
      %2314 = vmatprep.mubr.f32.mxu0 0.0
      %2315 = vmatmul.mubr.f32.gmra.mxu0 %v2172
      %v2316 = vpop.f32.mrf.mxu0
      %v2317 = vadd.f32 %v1737, %v2316
      %v2318 = vpop.f32.mrf.mxu0
      %2319 = vmatprep.mubr.f32.mxu0 0.0
      %2320 = vmatmul.mubr.f32.gmra.mxu0 %v2174
      %v2321 = vpop.f32.mrf.mxu0
      %v2322 = vadd.f32 %v1737, %v2321
      %v2323 = vpop.f32.mrf.mxu0
      %2324 = vmatprep.mubr.f32.mxu0 0.0
      %2325 = vmatmul.mubr.f32.gmra.mxu0 %v2176
      %v2326 = vpop.f32.mrf.mxu0
      %v2327 = vadd.f32 %v1737, %v2326
      %v2328 = vpop.f32.mrf.mxu0
      %2329 = vmatprep.mubr.f32.mxu0 0.0
      %2330 = vmatmul.mubr.f32.gmra.mxu0 %v2178
      %v2331 = vpop.f32.mrf.mxu0
      %v2332 = vadd.f32 %v1737, %v2331
      %v2333 = vpop.f32.mrf.mxu0
      %2334 = vmatprep.mubr.f32.mxu0 0.0
      %2335 = vmatmul.mubr.f32.gmra.mxu0 %v2180
      %v2336 = vpop.f32.mrf.mxu0
      %v2337 = vadd.f32 %v1737, %v2336
      %v2338 = vpop.f32.mrf.mxu0
      %2339 = vmatprep.mubr.f32.mxu0 0.0
      %2340 = vmatmul.mubr.f32.gmra.mxu0 %v2182
      %v2341 = vpop.f32.mrf.mxu0
      %v2342 = vadd.f32 %v1737, %v2341
      %v2343 = vpop.f32.mrf.mxu0
      %2344 = vmatprep.mubr.f32.mxu0 0.0
      %2345 = vmatmul.mubr.f32.gmra.mxu0 %v2184
      %v2346 = vpop.f32.mrf.mxu0
      %v2347 = vadd.f32 %v1737, %v2346
      %v2348 = vpop.f32.mrf.mxu0
      %2349 = vmatprep.mubr.f32.mxu0 0.0
      %2350 = vmatmul.mubr.f32.gmra.mxu0 %v2186
      %v2351 = vpop.f32.mrf.mxu0
      %v2352 = vadd.f32 %v1737, %v2351
      %v2353 = vpop.f32.mrf.mxu0
      %2354 = vmatprep.mubr.f32.mxu0 0.0
      %2355 = vmatmul.mubr.f32.gmra.mxu0 %v2188
      %v2356 = vpop.f32.mrf.mxu0
      %v2357 = vadd.f32 %v1737, %v2356
      %v2358 = vpop.f32.mrf.mxu0
      %2359 = vmatprep.mubr.f32.mxu0 0.0
      %2360 = vmatmul.mubr.f32.gmra.mxu0 %v2190
      %v2361 = vpop.f32.mrf.mxu0
      %v2362 = vadd.f32 %v1737, %v2361
      %v2363 = vpop.f32.mrf.mxu0
      %2364 = vmatprep.mubr.f32.mxu0 0.0
      %2365 = vmatmul.mubr.f32.gmra.mxu0 %v2192
      %v2366 = vpop.f32.mrf.mxu0
      %v2367 = vadd.f32 %v1737, %v2366
      %v2368 = vpop.f32.mrf.mxu0
      %2369 = vmatprep.mubr.f32.mxu0 0.0
      %2370 = vmatmul.mubr.f32.gmra.mxu0 %v2194
      %v2371 = vpop.f32.mrf.mxu0
      %v2372 = vadd.f32 %v1737, %v2371
      %v2373 = vpop.f32.mrf.mxu0
      %2374 = vmatprep.mubr.f32.mxu0 0.0
      %2375 = vmatmul.mubr.f32.gmra.mxu0 %v2196
      %v2376 = vpop.f32.mrf.mxu0
      %v2377 = vadd.f32 %v1737, %v2376
      %v2378 = vpop.f32.mrf.mxu0
      %2379 = vmatprep.mubr.f32.mxu0 0.0
      %2380 = vmatmul.mubr.f32.gmra.mxu0 %v2198
      %v2381 = vpop.f32.mrf.mxu0
      %v2382 = vadd.f32 %v1737, %v2381
      %v2383 = vpop.f32.mrf.mxu0
      %2384 = vmatprep.mubr.f32.mxu0 0.0
      %2385 = vmatmul.mubr.f32.gmra.mxu0 %v2200
      %v2386 = vpop.f32.mrf.mxu0
      %v2387 = vadd.f32 %v1737, %v2386
      %v2388 = vpop.f32.mrf.mxu0
      %2389 = vmatprep.mubr.f32.mxu0 0.0
      %2390 = vmatmul.mubr.f32.gmra.mxu0 %v2202
      %v2391 = vpop.f32.mrf.mxu0
      %v2392 = vadd.f32 %v1737, %v2391
      %v2393 = vpop.f32.mrf.mxu0
      %2394 = vmatprep.mubr.f32.mxu0 0.0
      %2395 = vmatmul.mubr.f32.gmra.mxu0 %v2204
      %v2396 = vpop.f32.mrf.mxu0
      %v2397 = vadd.f32 %v1737, %v2396
      %v2398 = vpop.f32.mrf.mxu0
      %2399 = vdwg.mxu0
      %v2400 = vlaneseq
      %v2401 = vand.u32 %v2400, 127
      %v2402 = vsub.f32 0.0, %v2277
      %v2403 = vsub.f32 0.0, %v2282
      %v2404 = vsub.f32 0.0, %v2287
      %v2405 = vsub.f32 0.0, %v2292
      %v2406 = vsub.f32 0.0, %v2297
      %v2407 = vsub.f32 0.0, %v2302
      %v2408 = vsub.f32 0.0, %v2307
      %v2409 = vsub.f32 0.0, %v2312
      %v2410 = vsub.f32 0.0, %v2317
      %v2411 = vsub.f32 0.0, %v2322
      %v2412 = vsub.f32 0.0, %v2327
      %v2413 = vsub.f32 0.0, %v2332
      %v2414 = vsub.f32 0.0, %v2337
      %v2415 = vsub.f32 0.0, %v2342
      %v2416 = vsub.f32 0.0, %v2347
      %v2417 = vsub.f32 0.0, %v2352
      %v2418 = vsub.f32 0.0, %v2357
      %v2419 = vsub.f32 0.0, %v2362
      %v2420 = vsub.f32 0.0, %v2367
      %v2421 = vsub.f32 0.0, %v2372
      %v2422 = vsub.f32 0.0, %v2377
      %v2423 = vsub.f32 0.0, %v2382
      %v2424 = vsub.f32 0.0, %v2387
      %v2425 = vsub.f32 0.0, %v2392
      %v2426 = vsub.f32 0.0, %v2397
      %v2427 = vmul.f32 %v2402, 1.442695
      %v2428 = vpow.pop %v2427
      %v2429 = vmul.f32 %v2403, 1.442695
      %v2430 = vpow.pop %v2429
      %v2431 = vmul.f32 %v2404, 1.442695
      %v2432 = vpow.pop %v2431
      %v2433 = vmul.f32 %v2405, 1.442695
      %v2434 = vpow.pop %v2433
      %v2435 = vmul.f32 %v2406, 1.442695
      %v2436 = vpow.pop %v2435
      %v2437 = vmul.f32 %v2407, 1.442695
      %v2438 = vpow.pop %v2437
      %v2439 = vmul.f32 %v2408, 1.442695
      %v2440 = vpow.pop %v2439
      %v2441 = vmul.f32 %v2409, 1.442695
      %v2442 = vpow.pop %v2441
      %v2443 = vmul.f32 %v2410, 1.442695
      %v2444 = vpow.pop %v2443
      %v2445 = vmul.f32 %v2411, 1.442695
      %v2446 = vpow.pop %v2445
      %v2447 = vmul.f32 %v2412, 1.442695
      %v2448 = vpow.pop %v2447
      %v2449 = vmul.f32 %v2413, 1.442695
      %v2450 = vpow.pop %v2449
      %v2451 = vmul.f32 %v2414, 1.442695
      %v2452 = vpow.pop %v2451
      %v2453 = vmul.f32 %v2415, 1.442695
      %v2454 = vpow.pop %v2453
      %v2455 = vmul.f32 %v2416, 1.442695
      %v2456 = vpow.pop %v2455
      %v2457 = vmul.f32 %v2417, 1.442695
      %v2458 = vpow.pop %v2457
      %v2459 = vmul.f32 %v2418, 1.442695
      %v2460 = vpow.pop %v2459
      %v2461 = vmul.f32 %v2419, 1.442695
      %v2462 = vpow.pop %v2461
      %v2463 = vmul.f32 %v2420, 1.442695
      %v2464 = vpow.pop %v2463
      %v2465 = vmul.f32 %v2421, 1.442695
      %v2466 = vpow.pop %v2465
      %v2467 = vmul.f32 %v2422, 1.442695
      %v2468 = vpow.pop %v2467
      %v2469 = vmul.f32 %v2423, 1.442695
      %v2470 = vpow.pop %v2469
      %v2471 = vmul.f32 %v2424, 1.442695
      %v2472 = vpow.pop %v2471
      %v2473 = vmul.f32 %v2425, 1.442695
      %v2474 = vpow.pop %v2473
      %v2475 = vmul.f32 %v2426, 1.442695
      %v2476 = vpow.pop %v2475
      %v2477 = vadd.f32 %v2428, 1.0
      %v2478 = vadd.f32 %v2430, 1.0
      %v2479 = vadd.f32 %v2432, 1.0
      %v2480 = vadd.f32 %v2434, 1.0
      %v2481 = vadd.f32 %v2436, 1.0
      %v2482 = vadd.f32 %v2438, 1.0
      %v2483 = vadd.f32 %v2440, 1.0
      %v2484 = vadd.f32 %v2442, 1.0
      %v2485 = vadd.f32 %v2444, 1.0
      %v2486 = vadd.f32 %v2446, 1.0
      %v2487 = vadd.f32 %v2448, 1.0
      %v2488 = vadd.f32 %v2450, 1.0
      %v2489 = vadd.f32 %v2452, 1.0
      %v2490 = vadd.f32 %v2454, 1.0
      %v2491 = vadd.f32 %v2456, 1.0
      %v2492 = vadd.f32 %v2458, 1.0
      %v2493 = vadd.f32 %v2460, 1.0
      %v2494 = vadd.f32 %v2462, 1.0
      %v2495 = vadd.f32 %v2464, 1.0
      %v2496 = vadd.f32 %v2466, 1.0
      %v2497 = vadd.f32 %v2468, 1.0
      %v2498 = vadd.f32 %v2470, 1.0
      %v2499 = vadd.f32 %v2472, 1.0
      %v2500 = vadd.f32 %v2474, 1.0
      %v2501 = vadd.f32 %v2476, 1.0
      %v2502 = vrcp.pop %v2477
      %v2503 = vrcp.pop %v2478
      %v2504 = vrcp.pop %v2479
      %v2505 = vrcp.pop %v2480
      %v2506 = vrcp.pop %v2481
      %v2507 = vrcp.pop %v2482
      %v2508 = vrcp.pop %v2483
      %v2509 = vrcp.pop %v2484
      %v2510 = vrcp.pop %v2485
      %v2511 = vrcp.pop %v2486
      %v2512 = vrcp.pop %v2487
      %v2513 = vrcp.pop %v2488
      %v2514 = vrcp.pop %v2489
      %v2515 = vrcp.pop %v2490
      %v2516 = vrcp.pop %v2491
      %v2517 = vrcp.pop %v2492
      %v2518 = vrcp.pop %v2493
      %v2519 = vrcp.pop %v2494
      %v2520 = vrcp.pop %v2495
      %v2521 = vrcp.pop %v2496
      %v2522 = vrcp.pop %v2497
      %v2523 = vrcp.pop %v2498
      %v2524 = vrcp.pop %v2499
      %v2525 = vrcp.pop %v2500
      %v2526 = vrcp.pop %v2501
      %vm2527 = vcmp.lt.s32.totalorder %v2401, 64
      %v2528 = vsel %vm2527, %v2277, %v2502
      %v2529 = vsel %vm2527, %v2282, %v2503
      %v2530 = vsel %vm2527, %v2287, %v2504
      %v2531 = vsel %vm2527, %v2292, %v2505
      %v2532 = vsel %vm2527, %v2297, %v2506
      %v2533 = vsel %vm2527, %v2302, %v2507
      %v2534 = vsel %vm2527, %v2307, %v2508
      %v2535 = vsel %vm2527, %v2312, %v2509
      %v2536 = vsel %vm2527, %v2317, %v2510
      %v2537 = vsel %vm2527, %v2322, %v2511
      %v2538 = vsel %vm2527, %v2327, %v2512
      %v2539 = vsel %vm2527, %v2332, %v2513
      %v2540 = vsel %vm2527, %v2337, %v2514
      %v2541 = vsel %vm2527, %v2342, %v2515
      %v2542 = vsel %vm2527, %v2347, %v2516
      %v2543 = vsel %vm2527, %v2352, %v2517
      %v2544 = vsel %vm2527, %v2357, %v2518
      %v2545 = vsel %vm2527, %v2362, %v2519
      %v2546 = vsel %vm2527, %v2367, %v2520
      %v2547 = vsel %vm2527, %v2372, %v2521
      %v2548 = vsel %vm2527, %v2377, %v2522
      %v2549 = vsel %vm2527, %v2382, %v2523
      %v2550 = vsel %vm2527, %v2387, %v2524
      %v2551 = vsel %vm2527, %v2392, %v2525
      %v2552 = vsel %vm2527, %v2397, %v2526
      %v2578 = vcombine.high %v2528, %v2528
      %v2580 = vunpack.c.l.s4 1983009808
      %v2581 = vunpack.c.0.s8 %v2580
      %v2582 = vlaneseq
      %v2583 = vshrl.u32 %v2582, 7
      %v2584 = vsub.s32 %v2581, %v2583
      %v2585 = vrot.slane %v2528, %v2584
      %v2587 = vunpack.c.l.s4 1983009808
      %v2588 = vunpack.c.0.s8 %v2587
      %v2589 = vlaneseq
      %v2590 = vshrl.u32 %v2589, 7
      %v2591 = vsub.s32 %v2588, %v2590
      %v2592 = vrot.slane %v2578, %v2591
      %v2593 = vcombine.high %v2585, %v2585
      %v2594 = vcombine.high %v2592, %v2592
      %v2595 = vcombine.high %v2529, %v2529
      %v2597 = vunpack.c.l.s4 1983009808
      %v2598 = vunpack.c.0.s8 %v2597
      %v2599 = vlaneseq
      %v2600 = vshrl.u32 %v2599, 7
      %v2601 = vsub.s32 %v2598, %v2600
      %v2602 = vrot.slane %v2529, %v2601
      %v2604 = vunpack.c.l.s4 1983009808
      %v2605 = vunpack.c.0.s8 %v2604
      %v2606 = vlaneseq
      %v2607 = vshrl.u32 %v2606, 7
      %v2608 = vsub.s32 %v2605, %v2607
      %v2609 = vrot.slane %v2595, %v2608
      %v2610 = vcombine.high %v2602, %v2602
      %v2611 = vcombine.high %v2609, %v2609
      %v2612 = vcombine.high %v2530, %v2530
      %v2614 = vunpack.c.l.s4 1983009808
      %v2615 = vunpack.c.0.s8 %v2614
      %v2616 = vlaneseq
      %v2617 = vshrl.u32 %v2616, 7
      %v2618 = vsub.s32 %v2615, %v2617
      %v2619 = vrot.slane %v2530, %v2618
      %v2621 = vunpack.c.l.s4 1983009808
      %v2622 = vunpack.c.0.s8 %v2621
      %v2623 = vlaneseq
      %v2624 = vshrl.u32 %v2623, 7
      %v2625 = vsub.s32 %v2622, %v2624
      %v2626 = vrot.slane %v2612, %v2625
      %v2627 = vcombine.high %v2619, %v2619
      %v2628 = vcombine.high %v2626, %v2626
      %v2629 = vcombine.high %v2531, %v2531
      %v2631 = vunpack.c.l.s4 1983009808
      %v2632 = vunpack.c.0.s8 %v2631
      %v2633 = vlaneseq
      %v2634 = vshrl.u32 %v2633, 7
      %v2635 = vsub.s32 %v2632, %v2634
      %v2636 = vrot.slane %v2531, %v2635
      %v2638 = vunpack.c.l.s4 1983009808
      %v2639 = vunpack.c.0.s8 %v2638
      %v2640 = vlaneseq
      %v2641 = vshrl.u32 %v2640, 7
      %v2642 = vsub.s32 %v2639, %v2641
      %v2643 = vrot.slane %v2629, %v2642
      %v2644 = vcombine.high %v2636, %v2636
      %v2645 = vcombine.high %v2643, %v2643
      %v2646 = vcombine.high %v2532, %v2532
      %v2648 = vunpack.c.l.s4 1983009808
      %v2649 = vunpack.c.0.s8 %v2648
      %v2650 = vlaneseq
      %v2651 = vshrl.u32 %v2650, 7
      %v2652 = vsub.s32 %v2649, %v2651
      %v2653 = vrot.slane %v2532, %v2652
      %v2655 = vunpack.c.l.s4 1983009808
      %v2656 = vunpack.c.0.s8 %v2655
      %v2657 = vlaneseq
      %v2658 = vshrl.u32 %v2657, 7
      %v2659 = vsub.s32 %v2656, %v2658
      %v2660 = vrot.slane %v2646, %v2659
      %v2661 = vcombine.high %v2653, %v2653
      %v2662 = vcombine.high %v2660, %v2660
      %v2663 = vcombine.high %v2533, %v2533
      %v2665 = vunpack.c.l.s4 1983009808
      %v2666 = vunpack.c.0.s8 %v2665
      %v2667 = vlaneseq
      %v2668 = vshrl.u32 %v2667, 7
      %v2669 = vsub.s32 %v2666, %v2668
      %v2670 = vrot.slane %v2533, %v2669
      %v2672 = vunpack.c.l.s4 1983009808
      %v2673 = vunpack.c.0.s8 %v2672
      %v2674 = vlaneseq
      %v2675 = vshrl.u32 %v2674, 7
      %v2676 = vsub.s32 %v2673, %v2675
      %v2677 = vrot.slane %v2663, %v2676
      %v2678 = vcombine.high %v2670, %v2670
      %v2679 = vcombine.high %v2677, %v2677
      %v2680 = vcombine.high %v2534, %v2534
      %v2682 = vunpack.c.l.s4 1983009808
      %v2683 = vunpack.c.0.s8 %v2682
      %v2684 = vlaneseq
      %v2685 = vshrl.u32 %v2684, 7
      %v2686 = vsub.s32 %v2683, %v2685
      %v2687 = vrot.slane %v2534, %v2686
      %v2689 = vunpack.c.l.s4 1983009808
      %v2690 = vunpack.c.0.s8 %v2689
      %v2691 = vlaneseq
      %v2692 = vshrl.u32 %v2691, 7
      %v2693 = vsub.s32 %v2690, %v2692
      %v2694 = vrot.slane %v2680, %v2693
      %v2695 = vcombine.high %v2687, %v2687
      %v2696 = vcombine.high %v2694, %v2694
      %v2697 = vcombine.high %v2535, %v2535
      %v2699 = vunpack.c.l.s4 1983009808
      %v2700 = vunpack.c.0.s8 %v2699
      %v2701 = vlaneseq
      %v2702 = vshrl.u32 %v2701, 7
      %v2703 = vsub.s32 %v2700, %v2702
      %v2704 = vrot.slane %v2535, %v2703
      %v2706 = vunpack.c.l.s4 1983009808
      %v2707 = vunpack.c.0.s8 %v2706
      %v2708 = vlaneseq
      %v2709 = vshrl.u32 %v2708, 7
      %v2710 = vsub.s32 %v2707, %v2709
      %v2711 = vrot.slane %v2697, %v2710
      %v2712 = vcombine.high %v2704, %v2704
      %v2713 = vcombine.high %v2711, %v2711
      %v2714 = vcombine.high %v2536, %v2536
      %v2716 = vunpack.c.l.s4 1983009808
      %v2717 = vunpack.c.0.s8 %v2716
      %v2718 = vlaneseq
      %v2719 = vshrl.u32 %v2718, 7
      %v2720 = vsub.s32 %v2717, %v2719
      %v2721 = vrot.slane %v2536, %v2720
      %v2723 = vunpack.c.l.s4 1983009808
      %v2724 = vunpack.c.0.s8 %v2723
      %v2725 = vlaneseq
      %v2726 = vshrl.u32 %v2725, 7
      %v2727 = vsub.s32 %v2724, %v2726
      %v2728 = vrot.slane %v2714, %v2727
      %v2729 = vcombine.high %v2721, %v2721
      %v2730 = vcombine.high %v2728, %v2728
      %v2731 = vcombine.high %v2537, %v2537
      %v2733 = vunpack.c.l.s4 1983009808
      %v2734 = vunpack.c.0.s8 %v2733
      %v2735 = vlaneseq
      %v2736 = vshrl.u32 %v2735, 7
      %v2737 = vsub.s32 %v2734, %v2736
      %v2738 = vrot.slane %v2537, %v2737
      %v2740 = vunpack.c.l.s4 1983009808
      %v2741 = vunpack.c.0.s8 %v2740
      %v2742 = vlaneseq
      %v2743 = vshrl.u32 %v2742, 7
      %v2744 = vsub.s32 %v2741, %v2743
      %v2745 = vrot.slane %v2731, %v2744
      %v2746 = vcombine.high %v2738, %v2738
      %v2747 = vcombine.high %v2745, %v2745
      %v2748 = vcombine.high %v2538, %v2538
      %v2750 = vunpack.c.l.s4 1983009808
      %v2751 = vunpack.c.0.s8 %v2750
      %v2752 = vlaneseq
      %v2753 = vshrl.u32 %v2752, 7
      %v2754 = vsub.s32 %v2751, %v2753
      %v2755 = vrot.slane %v2538, %v2754
      %v2757 = vunpack.c.l.s4 1983009808
      %v2758 = vunpack.c.0.s8 %v2757
      %v2759 = vlaneseq
      %v2760 = vshrl.u32 %v2759, 7
      %v2761 = vsub.s32 %v2758, %v2760
      %v2762 = vrot.slane %v2748, %v2761
      %v2763 = vcombine.high %v2755, %v2755
      %v2764 = vcombine.high %v2762, %v2762
      %v2765 = vcombine.high %v2539, %v2539
      %v2767 = vunpack.c.l.s4 1983009808
      %v2768 = vunpack.c.0.s8 %v2767
      %v2769 = vlaneseq
      %v2770 = vshrl.u32 %v2769, 7
      %v2771 = vsub.s32 %v2768, %v2770
      %v2772 = vrot.slane %v2539, %v2771
      %v2774 = vunpack.c.l.s4 1983009808
      %v2775 = vunpack.c.0.s8 %v2774
      %v2776 = vlaneseq
      %v2777 = vshrl.u32 %v2776, 7
      %v2778 = vsub.s32 %v2775, %v2777
      %v2779 = vrot.slane %v2765, %v2778
      %v2780 = vcombine.high %v2772, %v2772
      %v2781 = vcombine.high %v2779, %v2779
      %v2782 = vcombine.high %v2540, %v2540
      %v2784 = vunpack.c.l.s4 1983009808
      %v2785 = vunpack.c.0.s8 %v2784
      %v2786 = vlaneseq
      %v2787 = vshrl.u32 %v2786, 7
      %v2788 = vsub.s32 %v2785, %v2787
      %v2789 = vrot.slane %v2540, %v2788
      %v2791 = vunpack.c.l.s4 1983009808
      %v2792 = vunpack.c.0.s8 %v2791
      %v2793 = vlaneseq
      %v2794 = vshrl.u32 %v2793, 7
      %v2795 = vsub.s32 %v2792, %v2794
      %v2796 = vrot.slane %v2782, %v2795
      %v2797 = vcombine.high %v2789, %v2789
      %v2798 = vcombine.high %v2796, %v2796
      %v2799 = vcombine.high %v2541, %v2541
      %v2801 = vunpack.c.l.s4 1983009808
      %v2802 = vunpack.c.0.s8 %v2801
      %v2803 = vlaneseq
      %v2804 = vshrl.u32 %v2803, 7
      %v2805 = vsub.s32 %v2802, %v2804
      %v2806 = vrot.slane %v2541, %v2805
      %v2808 = vunpack.c.l.s4 1983009808
      %v2809 = vunpack.c.0.s8 %v2808
      %v2810 = vlaneseq
      %v2811 = vshrl.u32 %v2810, 7
      %v2812 = vsub.s32 %v2809, %v2811
      %v2813 = vrot.slane %v2799, %v2812
      %v2814 = vcombine.high %v2806, %v2806
      %v2815 = vcombine.high %v2813, %v2813
      %v2816 = vcombine.high %v2542, %v2542
      %v2818 = vunpack.c.l.s4 1983009808
      %v2819 = vunpack.c.0.s8 %v2818
      %v2820 = vlaneseq
      %v2821 = vshrl.u32 %v2820, 7
      %v2822 = vsub.s32 %v2819, %v2821
      %v2823 = vrot.slane %v2542, %v2822
      %v2825 = vunpack.c.l.s4 1983009808
      %v2826 = vunpack.c.0.s8 %v2825
      %v2827 = vlaneseq
      %v2828 = vshrl.u32 %v2827, 7
      %v2829 = vsub.s32 %v2826, %v2828
      %v2830 = vrot.slane %v2816, %v2829
      %v2831 = vcombine.high %v2823, %v2823
      %v2832 = vcombine.high %v2830, %v2830
      %v2833 = vcombine.high %v2543, %v2543
      %v2835 = vunpack.c.l.s4 1983009808
      %v2836 = vunpack.c.0.s8 %v2835
      %v2837 = vlaneseq
      %v2838 = vshrl.u32 %v2837, 7
      %v2839 = vsub.s32 %v2836, %v2838
      %v2840 = vrot.slane %v2543, %v2839
      %v2842 = vunpack.c.l.s4 1983009808
      %v2843 = vunpack.c.0.s8 %v2842
      %v2844 = vlaneseq
      %v2845 = vshrl.u32 %v2844, 7
      %v2846 = vsub.s32 %v2843, %v2845
      %v2847 = vrot.slane %v2833, %v2846
      %v2848 = vcombine.high %v2840, %v2840
      %v2849 = vcombine.high %v2847, %v2847
      %v2850 = vcombine.high %v2544, %v2544
      %v2852 = vunpack.c.l.s4 1983009808
      %v2853 = vunpack.c.0.s8 %v2852
      %v2854 = vlaneseq
      %v2855 = vshrl.u32 %v2854, 7
      %v2856 = vsub.s32 %v2853, %v2855
      %v2857 = vrot.slane %v2544, %v2856
      %v2859 = vunpack.c.l.s4 1983009808
      %v2860 = vunpack.c.0.s8 %v2859
      %v2861 = vlaneseq
      %v2862 = vshrl.u32 %v2861, 7
      %v2863 = vsub.s32 %v2860, %v2862
      %v2864 = vrot.slane %v2850, %v2863
      %v2865 = vcombine.high %v2857, %v2857
      %v2866 = vcombine.high %v2864, %v2864
      %v2867 = vcombine.high %v2545, %v2545
      %v2869 = vunpack.c.l.s4 1983009808
      %v2870 = vunpack.c.0.s8 %v2869
      %v2871 = vlaneseq
      %v2872 = vshrl.u32 %v2871, 7
      %v2873 = vsub.s32 %v2870, %v2872
      %v2874 = vrot.slane %v2545, %v2873
      %v2876 = vunpack.c.l.s4 1983009808
      %v2877 = vunpack.c.0.s8 %v2876
      %v2878 = vlaneseq
      %v2879 = vshrl.u32 %v2878, 7
      %v2880 = vsub.s32 %v2877, %v2879
      %v2881 = vrot.slane %v2867, %v2880
      %v2882 = vcombine.high %v2874, %v2874
      %v2883 = vcombine.high %v2881, %v2881
      %v2884 = vcombine.high %v2546, %v2546
      %v2886 = vunpack.c.l.s4 1983009808
      %v2887 = vunpack.c.0.s8 %v2886
      %v2888 = vlaneseq
      %v2889 = vshrl.u32 %v2888, 7
      %v2890 = vsub.s32 %v2887, %v2889
      %v2891 = vrot.slane %v2546, %v2890
      %v2893 = vunpack.c.l.s4 1983009808
      %v2894 = vunpack.c.0.s8 %v2893
      %v2895 = vlaneseq
      %v2896 = vshrl.u32 %v2895, 7
      %v2897 = vsub.s32 %v2894, %v2896
      %v2898 = vrot.slane %v2884, %v2897
      %v2899 = vcombine.high %v2891, %v2891
      %v2900 = vcombine.high %v2898, %v2898
      %v2901 = vcombine.high %v2547, %v2547
      %v2903 = vunpack.c.l.s4 1983009808
      %v2904 = vunpack.c.0.s8 %v2903
      %v2905 = vlaneseq
      %v2906 = vshrl.u32 %v2905, 7
      %v2907 = vsub.s32 %v2904, %v2906
      %v2908 = vrot.slane %v2547, %v2907
      %v2910 = vunpack.c.l.s4 1983009808
      %v2911 = vunpack.c.0.s8 %v2910
      %v2912 = vlaneseq
      %v2913 = vshrl.u32 %v2912, 7
      %v2914 = vsub.s32 %v2911, %v2913
      %v2915 = vrot.slane %v2901, %v2914
      %v2916 = vcombine.high %v2908, %v2908
      %v2917 = vcombine.high %v2915, %v2915
      %v2918 = vcombine.high %v2548, %v2548
      %v2920 = vunpack.c.l.s4 1983009808
      %v2921 = vunpack.c.0.s8 %v2920
      %v2922 = vlaneseq
      %v2923 = vshrl.u32 %v2922, 7
      %v2924 = vsub.s32 %v2921, %v2923
      %v2925 = vrot.slane %v2548, %v2924
      %v2927 = vunpack.c.l.s4 1983009808
      %v2928 = vunpack.c.0.s8 %v2927
      %v2929 = vlaneseq
      %v2930 = vshrl.u32 %v2929, 7
      %v2931 = vsub.s32 %v2928, %v2930
      %v2932 = vrot.slane %v2918, %v2931
      %v2933 = vcombine.high %v2925, %v2925
      %v2934 = vcombine.high %v2932, %v2932
      %v2935 = vcombine.high %v2549, %v2549
      %v2937 = vunpack.c.l.s4 1983009808
      %v2938 = vunpack.c.0.s8 %v2937
      %v2939 = vlaneseq
      %v2940 = vshrl.u32 %v2939, 7
      %v2941 = vsub.s32 %v2938, %v2940
      %v2942 = vrot.slane %v2549, %v2941
      %v2944 = vunpack.c.l.s4 1983009808
      %v2945 = vunpack.c.0.s8 %v2944
      %v2946 = vlaneseq
      %v2947 = vshrl.u32 %v2946, 7
      %v2948 = vsub.s32 %v2945, %v2947
      %v2949 = vrot.slane %v2935, %v2948
      %v2950 = vcombine.high %v2942, %v2942
      %v2951 = vcombine.high %v2949, %v2949
      %v2952 = vcombine.high %v2550, %v2550
      %v2954 = vunpack.c.l.s4 1983009808
      %v2955 = vunpack.c.0.s8 %v2954
      %v2956 = vlaneseq
      %v2957 = vshrl.u32 %v2956, 7
      %v2958 = vsub.s32 %v2955, %v2957
      %v2959 = vrot.slane %v2550, %v2958
      %v2961 = vunpack.c.l.s4 1983009808
      %v2962 = vunpack.c.0.s8 %v2961
      %v2963 = vlaneseq
      %v2964 = vshrl.u32 %v2963, 7
      %v2965 = vsub.s32 %v2962, %v2964
      %v2966 = vrot.slane %v2952, %v2965
      %v2967 = vcombine.high %v2959, %v2959
      %v2968 = vcombine.high %v2966, %v2966
      %v2969 = vcombine.high %v2551, %v2551
      %v2971 = vunpack.c.l.s4 1983009808
      %v2972 = vunpack.c.0.s8 %v2971
      %v2973 = vlaneseq
      %v2974 = vshrl.u32 %v2973, 7
      %v2975 = vsub.s32 %v2972, %v2974
      %v2976 = vrot.slane %v2551, %v2975
      %v2978 = vunpack.c.l.s4 1983009808
      %v2979 = vunpack.c.0.s8 %v2978
      %v2980 = vlaneseq
      %v2981 = vshrl.u32 %v2980, 7
      %v2982 = vsub.s32 %v2979, %v2981
      %v2983 = vrot.slane %v2969, %v2982
      %v2984 = vcombine.high %v2976, %v2976
      %v2985 = vcombine.high %v2983, %v2983
      %v2987 = vunpack.c.l.s4 1983009808
      %v2988 = vunpack.c.0.s8 %v2987
      %v2989 = vlaneseq
      %v2990 = vshrl.u32 %v2989, 7
      %v2991 = vsub.s32 %v2988, %v2990
      %v2992 = vrot.slane %v2552, %v2991
      %v2993 = vcombine.high %v2992, %v2992
      %v2994 = vcombine.low %v2585, %v2593
      %v2995 = vcombine.low %v2592, %v2594
      %v2997 = vunpack.c.l.s4 1983009808
      %v2998 = vunpack.c.0.s8 %v2997
      %v2999 = vlaneseq
      %v3000 = vshrl.u32 %v2999, 7
      %v3001 = vsub.s32 %v2998, %v3000
      %v3002 = vrot.slane %v2994, %v3001
      %v3004 = vunpack.c.l.s4 1983009808
      %v3005 = vunpack.c.0.s8 %v3004
      %v3006 = vlaneseq
      %v3007 = vshrl.u32 %v3006, 7
      %v3008 = vsub.s32 %v3005, %v3007
      %v3009 = vrot.slane %v2995, %v3008
      %v3010 = vcombine.low %v3002, %v3009
      %v3011 = vcombine.low %v2602, %v2610
      %v3013 = vunpack.c.l.s4 1983009808
      %v3014 = vunpack.c.0.s8 %v3013
      %v3015 = vlaneseq
      %v3016 = vshrl.u32 %v3015, 7
      %v3017 = vsub.s32 %v3014, %v3016
      %v3018 = vrot.slane %v3011, %v3017
      %v3020 = vunpack.c.l.s4 1983009808
      %v3021 = vunpack.c.0.s8 %v3020
      %v3022 = vlaneseq
      %v3023 = vshrl.u32 %v3022, 7
      %v3024 = vsub.s32 %v3021, %v3023
      %v3025 = vrot.slane %v2609, %v3024
      %v3026 = vcombine.low %v3018, %v3025
      %v3027 = vcombine.low %v2611, %v2619
      %v3028 = vcombine.low %v2627, %v2626
      %v3030 = vunpack.c.l.s4 1983009808
      %v3031 = vunpack.c.0.s8 %v3030
      %v3032 = vlaneseq
      %v3033 = vshrl.u32 %v3032, 7
      %v3034 = vsub.s32 %v3031, %v3033
      %v3035 = vrot.slane %v3027, %v3034
      %v3037 = vunpack.c.l.s4 1983009808
      %v3038 = vunpack.c.0.s8 %v3037
      %v3039 = vlaneseq
      %v3040 = vshrl.u32 %v3039, 7
      %v3041 = vsub.s32 %v3038, %v3040
      %v3042 = vrot.slane %v3028, %v3041
      %v3043 = vcombine.low %v3035, %v3042
      %v3044 = vcombine.low %v2628, %v2636
      %v3046 = vunpack.c.l.s4 1983009808
      %v3047 = vunpack.c.0.s8 %v3046
      %v3048 = vlaneseq
      %v3049 = vshrl.u32 %v3048, 7
      %v3050 = vsub.s32 %v3047, %v3049
      %v3051 = vrot.slane %v3044, %v3050
      %v3053 = vunpack.c.l.s4 1983009808
      %v3054 = vunpack.c.0.s8 %v3053
      %v3055 = vlaneseq
      %v3056 = vshrl.u32 %v3055, 7
      %v3057 = vsub.s32 %v3054, %v3056
      %v3058 = vrot.slane %v2644, %v3057
      %v3059 = vcombine.low %v3051, %v3058
      %v3060 = vcombine.low %v2643, %v2645
      %v3061 = vcombine.low %v2653, %v2661
      %v3063 = vunpack.c.l.s4 1983009808
      %v3064 = vunpack.c.0.s8 %v3063
      %v3065 = vlaneseq
      %v3066 = vshrl.u32 %v3065, 7
      %v3067 = vsub.s32 %v3064, %v3066
      %v3068 = vrot.slane %v3060, %v3067
      %v3070 = vunpack.c.l.s4 1983009808
      %v3071 = vunpack.c.0.s8 %v3070
      %v3072 = vlaneseq
      %v3073 = vshrl.u32 %v3072, 7
      %v3074 = vsub.s32 %v3071, %v3073
      %v3075 = vrot.slane %v3061, %v3074
      %v3076 = vcombine.low %v3068, %v3075
      %v3077 = vcombine.low %v2660, %v2662
      %v3079 = vunpack.c.l.s4 1983009808
      %v3080 = vunpack.c.0.s8 %v3079
      %v3081 = vlaneseq
      %v3082 = vshrl.u32 %v3081, 7
      %v3083 = vsub.s32 %v3080, %v3082
      %v3084 = vrot.slane %v3077, %v3083
      %v3086 = vunpack.c.l.s4 1983009808
      %v3087 = vunpack.c.0.s8 %v3086
      %v3088 = vlaneseq
      %v3089 = vshrl.u32 %v3088, 7
      %v3090 = vsub.s32 %v3087, %v3089
      %v3091 = vrot.slane %v2670, %v3090
      %v3092 = vcombine.low %v3084, %v3091
      %v3093 = vcombine.low %v2678, %v2677
      %v3094 = vcombine.low %v2679, %v2687
      %v3096 = vunpack.c.l.s4 1983009808
      %v3097 = vunpack.c.0.s8 %v3096
      %v3098 = vlaneseq
      %v3099 = vshrl.u32 %v3098, 7
      %v3100 = vsub.s32 %v3097, %v3099
      %v3101 = vrot.slane %v3093, %v3100
      %v3103 = vunpack.c.l.s4 1983009808
      %v3104 = vunpack.c.0.s8 %v3103
      %v3105 = vlaneseq
      %v3106 = vshrl.u32 %v3105, 7
      %v3107 = vsub.s32 %v3104, %v3106
      %v3108 = vrot.slane %v3094, %v3107
      %v3109 = vcombine.low %v3101, %v3108
      %v3110 = vcombine.low %v2695, %v2694
      %v3112 = vunpack.c.l.s4 1983009808
      %v3113 = vunpack.c.0.s8 %v3112
      %v3114 = vlaneseq
      %v3115 = vshrl.u32 %v3114, 7
      %v3116 = vsub.s32 %v3113, %v3115
      %v3117 = vrot.slane %v3110, %v3116
      %v3119 = vunpack.c.l.s4 1983009808
      %v3120 = vunpack.c.0.s8 %v3119
      %v3121 = vlaneseq
      %v3122 = vshrl.u32 %v3121, 7
      %v3123 = vsub.s32 %v3120, %v3122
      %v3124 = vrot.slane %v2696, %v3123
      %v3125 = vcombine.low %v3117, %v3124
      %v3126 = vcombine.low %v2704, %v2712
      %v3127 = vcombine.low %v2711, %v2713
      %v3129 = vunpack.c.l.s4 1983009808
      %v3130 = vunpack.c.0.s8 %v3129
      %v3131 = vlaneseq
      %v3132 = vshrl.u32 %v3131, 7
      %v3133 = vsub.s32 %v3130, %v3132
      %v3134 = vrot.slane %v3126, %v3133
      %v3136 = vunpack.c.l.s4 1983009808
      %v3137 = vunpack.c.0.s8 %v3136
      %v3138 = vlaneseq
      %v3139 = vshrl.u32 %v3138, 7
      %v3140 = vsub.s32 %v3137, %v3139
      %v3141 = vrot.slane %v3127, %v3140
      %v3142 = vcombine.low %v3134, %v3141
      %v3143 = vcombine.low %v2721, %v2729
      %v3145 = vunpack.c.l.s4 1983009808
      %v3146 = vunpack.c.0.s8 %v3145
      %v3147 = vlaneseq
      %v3148 = vshrl.u32 %v3147, 7
      %v3149 = vsub.s32 %v3146, %v3148
      %v3150 = vrot.slane %v3143, %v3149
      %v3152 = vunpack.c.l.s4 1983009808
      %v3153 = vunpack.c.0.s8 %v3152
      %v3154 = vlaneseq
      %v3155 = vshrl.u32 %v3154, 7
      %v3156 = vsub.s32 %v3153, %v3155
      %v3157 = vrot.slane %v2728, %v3156
      %v3158 = vcombine.low %v3150, %v3157
      %v3159 = vcombine.low %v2730, %v2738
      %v3160 = vcombine.low %v2746, %v2745
      %v3162 = vunpack.c.l.s4 1983009808
      %v3163 = vunpack.c.0.s8 %v3162
      %v3164 = vlaneseq
      %v3165 = vshrl.u32 %v3164, 7
      %v3166 = vsub.s32 %v3163, %v3165
      %v3167 = vrot.slane %v3159, %v3166
      %v3169 = vunpack.c.l.s4 1983009808
      %v3170 = vunpack.c.0.s8 %v3169
      %v3171 = vlaneseq
      %v3172 = vshrl.u32 %v3171, 7
      %v3173 = vsub.s32 %v3170, %v3172
      %v3174 = vrot.slane %v3160, %v3173
      %v3175 = vcombine.low %v3167, %v3174
      %v3176 = vcombine.low %v2747, %v2755
      %v3178 = vunpack.c.l.s4 1983009808
      %v3179 = vunpack.c.0.s8 %v3178
      %v3180 = vlaneseq
      %v3181 = vshrl.u32 %v3180, 7
      %v3182 = vsub.s32 %v3179, %v3181
      %v3183 = vrot.slane %v3176, %v3182
      %v3185 = vunpack.c.l.s4 1983009808
      %v3186 = vunpack.c.0.s8 %v3185
      %v3187 = vlaneseq
      %v3188 = vshrl.u32 %v3187, 7
      %v3189 = vsub.s32 %v3186, %v3188
      %v3190 = vrot.slane %v2763, %v3189
      %v3191 = vcombine.low %v3183, %v3190
      %v3192 = vcombine.low %v2762, %v2764
      %v3193 = vcombine.low %v2772, %v2780
      %v3195 = vunpack.c.l.s4 1983009808
      %v3196 = vunpack.c.0.s8 %v3195
      %v3197 = vlaneseq
      %v3198 = vshrl.u32 %v3197, 7
      %v3199 = vsub.s32 %v3196, %v3198
      %v3200 = vrot.slane %v3192, %v3199
      %v3202 = vunpack.c.l.s4 1983009808
      %v3203 = vunpack.c.0.s8 %v3202
      %v3204 = vlaneseq
      %v3205 = vshrl.u32 %v3204, 7
      %v3206 = vsub.s32 %v3203, %v3205
      %v3207 = vrot.slane %v3193, %v3206
      %v3208 = vcombine.low %v3200, %v3207
      %v3209 = vcombine.low %v2779, %v2781
      %v3211 = vunpack.c.l.s4 1983009808
      %v3212 = vunpack.c.0.s8 %v3211
      %v3213 = vlaneseq
      %v3214 = vshrl.u32 %v3213, 7
      %v3215 = vsub.s32 %v3212, %v3214
      %v3216 = vrot.slane %v3209, %v3215
      %v3218 = vunpack.c.l.s4 1983009808
      %v3219 = vunpack.c.0.s8 %v3218
      %v3220 = vlaneseq
      %v3221 = vshrl.u32 %v3220, 7
      %v3222 = vsub.s32 %v3219, %v3221
      %v3223 = vrot.slane %v2789, %v3222
      %v3224 = vcombine.low %v3216, %v3223
      %v3225 = vcombine.low %v2797, %v2796
      %v3226 = vcombine.low %v2798, %v2806
      %v3228 = vunpack.c.l.s4 1983009808
      %v3229 = vunpack.c.0.s8 %v3228
      %v3230 = vlaneseq
      %v3231 = vshrl.u32 %v3230, 7
      %v3232 = vsub.s32 %v3229, %v3231
      %v3233 = vrot.slane %v3225, %v3232
      %v3235 = vunpack.c.l.s4 1983009808
      %v3236 = vunpack.c.0.s8 %v3235
      %v3237 = vlaneseq
      %v3238 = vshrl.u32 %v3237, 7
      %v3239 = vsub.s32 %v3236, %v3238
      %v3240 = vrot.slane %v3226, %v3239
      %v3241 = vcombine.low %v3233, %v3240
      %v3242 = vcombine.low %v2814, %v2813
      %v3244 = vunpack.c.l.s4 1983009808
      %v3245 = vunpack.c.0.s8 %v3244
      %v3246 = vlaneseq
      %v3247 = vshrl.u32 %v3246, 7
      %v3248 = vsub.s32 %v3245, %v3247
      %v3249 = vrot.slane %v3242, %v3248
      %v3251 = vunpack.c.l.s4 1983009808
      %v3252 = vunpack.c.0.s8 %v3251
      %v3253 = vlaneseq
      %v3254 = vshrl.u32 %v3253, 7
      %v3255 = vsub.s32 %v3252, %v3254
      %v3256 = vrot.slane %v2815, %v3255
      %v3257 = vcombine.low %v3249, %v3256
      %v3258 = vcombine.low %v2823, %v2831
      %v3259 = vcombine.low %v2830, %v2832
      %v3261 = vunpack.c.l.s4 1983009808
      %v3262 = vunpack.c.0.s8 %v3261
      %v3263 = vlaneseq
      %v3264 = vshrl.u32 %v3263, 7
      %v3265 = vsub.s32 %v3262, %v3264
      %v3266 = vrot.slane %v3258, %v3265
      %v3268 = vunpack.c.l.s4 1983009808
      %v3269 = vunpack.c.0.s8 %v3268
      %v3270 = vlaneseq
      %v3271 = vshrl.u32 %v3270, 7
      %v3272 = vsub.s32 %v3269, %v3271
      %v3273 = vrot.slane %v3259, %v3272
      %v3274 = vcombine.low %v3266, %v3273
      %v3275 = vcombine.low %v2840, %v2848
      %v3277 = vunpack.c.l.s4 1983009808
      %v3278 = vunpack.c.0.s8 %v3277
      %v3279 = vlaneseq
      %v3280 = vshrl.u32 %v3279, 7
      %v3281 = vsub.s32 %v3278, %v3280
      %v3282 = vrot.slane %v3275, %v3281
      %v3284 = vunpack.c.l.s4 1983009808
      %v3285 = vunpack.c.0.s8 %v3284
      %v3286 = vlaneseq
      %v3287 = vshrl.u32 %v3286, 7
      %v3288 = vsub.s32 %v3285, %v3287
      %v3289 = vrot.slane %v2847, %v3288
      %v3290 = vcombine.low %v3282, %v3289
      %v3291 = vcombine.low %v2849, %v2857
      %v3292 = vcombine.low %v2865, %v2864
      %v3294 = vunpack.c.l.s4 1983009808
      %v3295 = vunpack.c.0.s8 %v3294
      %v3296 = vlaneseq
      %v3297 = vshrl.u32 %v3296, 7
      %v3298 = vsub.s32 %v3295, %v3297
      %v3299 = vrot.slane %v3291, %v3298
      %v3301 = vunpack.c.l.s4 1983009808
      %v3302 = vunpack.c.0.s8 %v3301
      %v3303 = vlaneseq
      %v3304 = vshrl.u32 %v3303, 7
      %v3305 = vsub.s32 %v3302, %v3304
      %v3306 = vrot.slane %v3292, %v3305
      %v3307 = vcombine.low %v3299, %v3306
      %v3308 = vcombine.low %v2866, %v2874
      %v3310 = vunpack.c.l.s4 1983009808
      %v3311 = vunpack.c.0.s8 %v3310
      %v3312 = vlaneseq
      %v3313 = vshrl.u32 %v3312, 7
      %v3314 = vsub.s32 %v3311, %v3313
      %v3315 = vrot.slane %v3308, %v3314
      %v3317 = vunpack.c.l.s4 1983009808
      %v3318 = vunpack.c.0.s8 %v3317
      %v3319 = vlaneseq
      %v3320 = vshrl.u32 %v3319, 7
      %v3321 = vsub.s32 %v3318, %v3320
      %v3322 = vrot.slane %v2882, %v3321
      %v3323 = vcombine.low %v3315, %v3322
      %v3324 = vcombine.low %v2881, %v2883
      %v3325 = vcombine.low %v2891, %v2899
      %v3327 = vunpack.c.l.s4 1983009808
      %v3328 = vunpack.c.0.s8 %v3327
      %v3329 = vlaneseq
      %v3330 = vshrl.u32 %v3329, 7
      %v3331 = vsub.s32 %v3328, %v3330
      %v3332 = vrot.slane %v3324, %v3331
      %v3334 = vunpack.c.l.s4 1983009808
      %v3335 = vunpack.c.0.s8 %v3334
      %v3336 = vlaneseq
      %v3337 = vshrl.u32 %v3336, 7
      %v3338 = vsub.s32 %v3335, %v3337
      %v3339 = vrot.slane %v3325, %v3338
      %v3340 = vcombine.low %v3332, %v3339
      %v3341 = vcombine.low %v2898, %v2900
      %v3343 = vunpack.c.l.s4 1983009808
      %v3344 = vunpack.c.0.s8 %v3343
      %v3345 = vlaneseq
      %v3346 = vshrl.u32 %v3345, 7
      %v3347 = vsub.s32 %v3344, %v3346
      %v3348 = vrot.slane %v3341, %v3347
      %v3350 = vunpack.c.l.s4 1983009808
      %v3351 = vunpack.c.0.s8 %v3350
      %v3352 = vlaneseq
      %v3353 = vshrl.u32 %v3352, 7
      %v3354 = vsub.s32 %v3351, %v3353
      %v3355 = vrot.slane %v2908, %v3354
      %v3356 = vcombine.low %v3348, %v3355
      %v3357 = vcombine.low %v2916, %v2915
      %v3358 = vcombine.low %v2917, %v2925
      %v3360 = vunpack.c.l.s4 1983009808
      %v3361 = vunpack.c.0.s8 %v3360
      %v3362 = vlaneseq
      %v3363 = vshrl.u32 %v3362, 7
      %v3364 = vsub.s32 %v3361, %v3363
      %v3365 = vrot.slane %v3357, %v3364
      %v3367 = vunpack.c.l.s4 1983009808
      %v3368 = vunpack.c.0.s8 %v3367
      %v3369 = vlaneseq
      %v3370 = vshrl.u32 %v3369, 7
      %v3371 = vsub.s32 %v3368, %v3370
      %v3372 = vrot.slane %v3358, %v3371
      %v3373 = vcombine.low %v3365, %v3372
      %v3374 = vcombine.low %v2933, %v2932
      %v3376 = vunpack.c.l.s4 1983009808
      %v3377 = vunpack.c.0.s8 %v3376
      %v3378 = vlaneseq
      %v3379 = vshrl.u32 %v3378, 7
      %v3380 = vsub.s32 %v3377, %v3379
      %v3381 = vrot.slane %v3374, %v3380
      %v3383 = vunpack.c.l.s4 1983009808
      %v3384 = vunpack.c.0.s8 %v3383
      %v3385 = vlaneseq
      %v3386 = vshrl.u32 %v3385, 7
      %v3387 = vsub.s32 %v3384, %v3386
      %v3388 = vrot.slane %v2934, %v3387
      %v3389 = vcombine.low %v3381, %v3388
      %v3390 = vcombine.low %v2942, %v2950
      %v3391 = vcombine.low %v2949, %v2951
      %v3393 = vunpack.c.l.s4 1983009808
      %v3394 = vunpack.c.0.s8 %v3393
      %v3395 = vlaneseq
      %v3396 = vshrl.u32 %v3395, 7
      %v3397 = vsub.s32 %v3394, %v3396
      %v3398 = vrot.slane %v3390, %v3397
      %v3400 = vunpack.c.l.s4 1983009808
      %v3401 = vunpack.c.0.s8 %v3400
      %v3402 = vlaneseq
      %v3403 = vshrl.u32 %v3402, 7
      %v3404 = vsub.s32 %v3401, %v3403
      %v3405 = vrot.slane %v3391, %v3404
      %v3406 = vcombine.low %v3398, %v3405
      %v3407 = vcombine.low %v2959, %v2967
      %v3409 = vunpack.c.l.s4 1983009808
      %v3410 = vunpack.c.0.s8 %v3409
      %v3411 = vlaneseq
      %v3412 = vshrl.u32 %v3411, 7
      %v3413 = vsub.s32 %v3410, %v3412
      %v3414 = vrot.slane %v3407, %v3413
      %v3416 = vunpack.c.l.s4 1983009808
      %v3417 = vunpack.c.0.s8 %v3416
      %v3418 = vlaneseq
      %v3419 = vshrl.u32 %v3418, 7
      %v3420 = vsub.s32 %v3417, %v3419
      %v3421 = vrot.slane %v2966, %v3420
      %v3422 = vcombine.low %v3414, %v3421
      %v3423 = vcombine.low %v2968, %v2976
      %v3424 = vcombine.low %v2984, %v2983
      %v3426 = vunpack.c.l.s4 1983009808
      %v3427 = vunpack.c.0.s8 %v3426
      %v3428 = vlaneseq
      %v3429 = vshrl.u32 %v3428, 7
      %v3430 = vsub.s32 %v3427, %v3429
      %v3431 = vrot.slane %v3423, %v3430
      %v3433 = vunpack.c.l.s4 1983009808
      %v3434 = vunpack.c.0.s8 %v3433
      %v3435 = vlaneseq
      %v3436 = vshrl.u32 %v3435, 7
      %v3437 = vsub.s32 %v3434, %v3436
      %v3438 = vrot.slane %v3424, %v3437
      %v3439 = vcombine.low %v3431, %v3438
      %v3440 = vcombine.low %v2985, %v2992
      %v3442 = vunpack.c.l.s4 1983009808
      %v3443 = vunpack.c.0.s8 %v3442
      %v3444 = vlaneseq
      %v3445 = vshrl.u32 %v3444, 7
      %v3446 = vsub.s32 %v3443, %v3445
      %v3447 = vrot.slane %v3440, %v3446
      %v3449 = vunpack.c.l.s4 1983009808
      %v3450 = vunpack.c.0.s8 %v3449
      %v3451 = vlaneseq
      %v3452 = vshrl.u32 %v3451, 7
      %v3453 = vsub.s32 %v3450, %v3452
      %v3454 = vrot.slane %v2993, %v3453
      %v3455 = vcombine.low %v3447, %v3454
      %3484 = vst [vmem:[%s170] sm:$0xff] %v3010
      %3485 = vst [vmem:[%s170 + $0x8] sm:$0x3f] %v3026
      %3486 = vst [vmem:[%s170 + $0x10] sm:$0xff] %v3043
      %3487 = vst [vmem:[%s170 + $0x18] sm:$0x3f] %v3059
      %3488 = vst [vmem:[%s170 + $0x20] sm:$0xff] %v3076
      %3489 = vst [vmem:[%s170 + $0x28] sm:$0x3f] %v3092
      %3490 = vst [vmem:[%s170 + $0x30] sm:$0xff] %v3109
      %3491 = vst [vmem:[%s170 + $0x38] sm:$0x3f] %v3125
      %3492 = vst [vmem:[%s170 + $0x40] sm:$0xff] %v3142
      %3493 = vst [vmem:[%s170 + $0x48] sm:$0x3f] %v3158
      %3494 = vst [vmem:[%s170 + $0x50] sm:$0xff] %v3175
      %3495 = vst [vmem:[%s170 + $0x58] sm:$0x3f] %v3191
      %3496 = vst [vmem:[%s170 + $0x60] sm:$0xff] %v3208
      %3497 = vst [vmem:[%s170 + $0x68] sm:$0x3f] %v3224
      %3498 = vst [vmem:[%s170 + $0x70] sm:$0xff] %v3241
      %3499 = vst [vmem:[%s170 + $0x78] sm:$0x3f] %v3257
      %3500 = vst [vmem:[%s170 + $0x80] sm:$0xff] %v3274
      %3501 = vst [vmem:[%s170 + $0x88] sm:$0x3f] %v3290
      %3502 = vst [vmem:[%s170 + $0x90] sm:$0xff] %v3307
      %3503 = vst [vmem:[%s170 + $0x98] sm:$0x3f] %v3323
      %3504 = vst [vmem:[%s170 + $0xa0] sm:$0xff] %v3340
      %3505 = vst [vmem:[%s170 + $0xa8] sm:$0x3f] %v3356
      %3506 = vst [vmem:[%s170 + $0xb0] sm:$0xff] %v3373
      %3507 = vst [vmem:[%s170 + $0xb8] sm:$0x3f] %v3389
      %3508 = vst [vmem:[%s170 + $0xc0] sm:$0xff] %v3406
      %3509 = vst [vmem:[%s170 + $0xc8] sm:$0x3f] %v3422
      %3510 = vst [vmem:[%s170 + $0xd0] sm:$0xff] %v3439
      %3511 = vst [vmem:[%s170 + $0xd8] sm:$0x3f] %v3455
      %p3512 = scmp.lt.s32.totalorder %s14, 1
      %s3513 = scalar_select %p3512, %s14, 1
      %s3514 = smul.addr %s3513, 28
      %s3515 = smul.addr %s3514, 8
      %s3516 = scalar_lea.vmem %s3, %s3515
      // Predicated region
      $region33: #{tpu_custom_call.1} parent=31 // pred_check
        %p3517 = pneg %p100
      $region34: #{tpu_custom_call.1} parent=31 // pred_check_branch
        %3519 = sbr.rel (%p3517) target = $region36
      $region35: #{tpu_custom_call.1} parent=31 // pred_region
        _
      $region36: #{tpu_custom_call.1} parent=31 // pred_fallthru
        _
    $region32: #{tpu_custom_call.1} parent=5 // pred_fallthru
      _
    %p3520 = scmp.le.s32.totalorder 2, %s9
    // Predicated region
    $region37: #{tpu_custom_call.1} parent=5 // pred_check
      %p3521 = pneg %p3520
    $region38: #{tpu_custom_call.1} parent=5 // pred_check_branch
      %3523 = sbr.rel (%p3521) target = $region40
    $region39: #{tpu_custom_call.1} parent=5 // pred_region
      %s3524 = ssub.s32 %s9, 2
      // Predicated region
      $region41: #{tpu_custom_call.1} parent=39 // pred_check
        %p3525 = pneg %p106
      $region42: #{tpu_custom_call.1} parent=39 // pred_check_branch
        %3527 = sbr.rel (%p3525) target = $region44
      $region43: #{tpu_custom_call.1} parent=39 // pred_region
        %p3528 = scmp.lt.s32.totalorder %s15, 1
        %s3529 = scalar_select %p3528, %s15, 1
        %s3530 = smul.addr %s3529, 28
        %s3531 = smul.addr %s3530, 8
        %s3532 = scalar_lea.vmem %s3, %s3531
      $region44: #{tpu_custom_call.1} parent=39 // pred_fallthru
        _
    $region40: #{tpu_custom_call.1} parent=5 // pred_fallthru
      _
  $region6: #{tpu_custom_call.1} parent=0 // loop_footer
    %s13 = sadd.s32 1, %s9
  $region7: #{tpu_custom_call.1} parent=0 // loop_footer_branch
    %8 = sbr.rel target = $region3
  $region8: #{tpu_custom_call.1} parent=0 // loop_exit
    _

</llo_original>
